<compile_context>
chip_gen: v7x
topology: tpu7x:2x2x1
jax: 0.10.0
libtpu: 0.0.40
codegen_flags: <defaults>
</compile_context>

<pallas_src>
import functools

import jax
import jax.numpy as jnp
from jax.experimental import pallas as pl
from jax.experimental.pallas import tpu as pltpu

_MIB = 1024 * 1024


def _round_up(x, m):
    return (x + m - 1) // m * m


def _vmem_budget_bytes():
    """Generation-aware VMEM budget for tile sizing.

    v7x has 64 MiB physical VMEM per TensorCore -> keep tiles (incl. double buffers)
    under ~40 MiB; v5e/v6e have 128 MiB -> allow up to ~100 MiB.
    """
    cap = None
    try:
        cap = int(pltpu.get_tpu_info().vmem_capacity_bytes)
    except Exception:
        try:
            kind = jax.devices()[0].device_kind.lower()
            if "v5" in kind or "v6" in kind:
                cap = 128 * _MIB
        except Exception:
            cap = None
    if cap is None:
        cap = 64 * _MIB          # conservative: assume v7x-sized VMEM
    return 40 * _MIB if cap <= 64 * _MIB else 100 * _MIB


def _convdu4_kernel_1k(x_ref, w_ref, b_ref, o_ref, *, negative_slope):
    """Single-K path: the full channel reduction is one MXU matmul (no accumulator).

    x_ref: (C, ts)   activation slab (batch i, spatial block q), input dtype
    w_ref: (tn, C)   bf16 centre-tap weight tile (constant block index -> resident)
    b_ref: (tn, 1)   f32 bias column
    o_ref: (tn, ts)  output tile (lane-dense)
    """
    z = jnp.dot(
        w_ref[...],
        x_ref[...].astype(jnp.bfloat16),      # no-op if the producer already gives bf16
        preferred_element_type=jnp.float32,
    )
    z = z + b_ref[...]                        # broadcast bias over lanes
    z = jnp.maximum(z, negative_slope * z)    # LeakyReLU(negative_slope)
    o_ref[...] = z.astype(o_ref.dtype)


def _convdu4_kernel_tiled(x_ref, w_ref, b_ref, o_ref, acc_ref, *, negative_slope):
    """Fallback for very large channel counts: K reduction tiled on the innermost axis."""
    k = pl.program_id(3)
    part = jnp.dot(
        w_ref[...],
        x_ref[...].astype(jnp.bfloat16),
        preferred_element_type=jnp.float32,
    )

    @pl.when(k == 0)
    def _first():
        acc_ref[...] = part                   # write first partial (no zero-fill pass)

    @pl.when(k > 0)
    def _rest():
        acc_ref[...] += part

    @pl.when(k == pl.num_programs(3) - 1)
    def _finalize():
        z = acc_ref[...] + b_ref[...]
        z = jnp.maximum(z, negative_slope * z)
        o_ref[...] = z.astype(o_ref.dtype)


def prepare_params(conv_weight, conv_bias):
    """One-time parameter prep (keep OUT of the per-call hot path).

    conv_weight: (OC, IC, KH, KW) float32  (PyTorch Conv2d layout)
    conv_bias:   (OC,)            float32
    Returns (w_eff, b_col): bf16 (OC, IC) centre-tap weight and f32 (OC, 1) bias.
    """
    oc, ic, kh, kw = conv_weight.shape
    assert kh % 2 == 1, "convDU4 per-row conv requires odd kernel height"
    # TODO(synk): kw > 1 would need a real convolution along W; default kernel is (9, 1).
    assert kw == 1, "only kernel width 1 supported (module default)"
    w_eff = conv_weight[:, :, kh // 2, 0].astype(jnp.bfloat16)      # (OC, IC) centre tap
    b_col = conv_bias.reshape(oc, 1).astype(jnp.float32)
    return w_eff, b_col


@functools.partial(jax.jit, static_argnames=("negative_slope", "force_tiled_k"))
def convdu4_forward(fea, w_eff, b_col, *, negative_slope=0.2, force_tiled_k=False):
    """fea: (N, C, H, W) f32 or bf16; w_eff: (OC, C) bf16; b_col: (OC, 1) f32."""
    n, c, h, w = fea.shape
    oc, c_w = w_eff.shape
    assert c_w == c
    s = h * w
    x_bytes = jnp.dtype(fea.dtype).itemsize      # activation is resident in VMEM at this width
    o_bytes = x_bytes                            # output dtype follows input dtype
    budget = _vmem_budget_bytes()

    # (N, C, H, W) -> (N, C, H*W): free reshape; no pads, no transposes, no output slice.
    x3 = fea.reshape(n, c, s)

    # Out-channel tile: full OC when it fits one MXU pass height; 256 otherwise
    # (partial last block handled by Pallas, so no OC padding is ever needed).
    tn = oc if oc <= 256 else 256
    j_steps = pl.cdiv(oc, tn)

    # Lane-dense spatial tile candidates (partial last block handled by Pallas).
    s_lane = _round_up(s, 128)
    if s < 128:
        ts_cands = [s]                           # tiny spatial: full-dim block
    else:
        ts_cands = [t for t in (2048, 1024, 512, 256, 128) if t <= s_lane]

    def est_1k(ts_):
        # x dbuf (full-C slab) + weight dbuf (bf16) + bias + output dbuf
        return (2 * c * ts_ * x_bytes + 2 * tn * c * 2 + 2 * tn * 4
                + 2 * tn * ts_ * o_bytes)

    # ------------------------------ single-K fast path ------------------------------
    single_k = not force_tiled_k
    ts = ts_cands[-1]
    if single_k:
        fits = [t for t in ts_cands if est_1k(t) <= budget]
        if fits:
            ts = fits[0]                         # largest tile that fits the budget
        else:
            single_k = False                     # C too large: fall back to tiled K

    if single_k:
        q_steps = pl.cdiv(s, ts)
        # v7x has 2 TensorCores: keep >= 2 parallel grid steps (split spatial if needed).
        if n * j_steps * q_steps < 2 and ts >= 256:
            ts //= 2
            q_steps = pl.cdiv(s, ts)
        # Weight block index depends only on j (innermost); with j_steps == 1 (OC <= 512
        # with tn=256) it is constant -> the weight is DMA'd from HBM exactly once.
        grid = (n, q_steps, j_steps)
        kernel = functools.partial(_convdu4_kernel_1k, negative_slope=negative_slope)
        out = pl.pallas_call(
            kernel,
            out_shape=jax.ShapeDtypeStruct((n, oc, s), fea.dtype),
            grid_spec=pltpu.PrefetchScalarGridSpec(
                num_scalar_prefetch=0,
                grid=grid,
                in_specs=[
                    pl.BlockSpec((None, c, ts), lambda i, q, j: (i, 0, q)),   # x (resident across j)
                    pl.BlockSpec((tn, c), lambda i, q, j: (j, 0)),            # weight
                    pl.BlockSpec((tn, 1), lambda i, q, j: (j, 0)),            # bias
                ],
                out_specs=pl.BlockSpec((None, tn, ts), lambda i, q, j: (i, j, q)),
            ),
            compiler_params=pltpu.CompilerParams(
                dimension_semantics=("parallel", "parallel", "parallel"),
                vmem_limit_bytes=budget,
            ),
        )(x3, w_eff, b_col)
        return out.reshape(n, oc, h, w)

    # ----------------------- tiled-K fallback (very large C) ------------------------
    # TODO(synk): here the weight is still re-streamed per (batch, spatial) block; a
    #             VMEM-resident weight via manual DMA would cut that traffic further.
    tk = next((t for t in (512, 256, 128) if c % t == 0), 512)
    c_pk = _round_up(c, tk)
    if c_pk != c:
        # Both operands must be zero-padded along C so padded columns contribute 0.
        x3 = jnp.pad(x3, ((0, 0), (0, c_pk - c), (0, 0)))
        w_k = jnp.pad(w_eff, ((0, 0), (0, c_pk - c)))
    else:
        w_k = w_eff
    k_steps = c_pk // tk

    def est_tiled(ts_):
        return (2 * tk * ts_ * x_bytes + 2 * tn * tk * 2 + 2 * tn * 4
                + 2 * tn * ts_ * o_bytes + tn * ts_ * 4)   # + f32 accumulator scratch

    fits = [t for t in ts_cands if est_tiled(t) <= budget]
    ts = fits[0] if fits else ts_cands[-1]
    q_steps = pl.cdiv(s, ts)

    grid = (n, j_steps, q_steps, k_steps)        # reduction axis last
    kernel = functools.partial(_convdu4_kernel_tiled, negative_slope=negative_slope)
    out = pl.pallas_call(
        kernel,
        out_shape=jax.ShapeDtypeStruct((n, oc, s), fea.dtype),
        grid_spec=pltpu.PrefetchScalarGridSpec(
            num_scalar_prefetch=0,
            grid=grid,
            in_specs=[
                pl.BlockSpec((None, tk, ts), lambda i, j, q, k: (i, k, q)),   # x
                pl.BlockSpec((tn, tk), lambda i, j, q, k: (j, k)),            # weight
                pl.BlockSpec((tn, 1), lambda i, j, q, k: (j, 0)),             # bias
            ],
            out_specs=pl.BlockSpec((None, tn, ts), lambda i, j, q, k: (i, j, q)),
            scratch_shapes=[pltpu.VMEM((tn, ts), jnp.float32)],
        ),
        compiler_params=pltpu.CompilerParams(
            dimension_semantics=("parallel", "parallel", "parallel", "arbitrary"),
            vmem_limit_bytes=budget,
        ),
    )(x3, w_k, b_col)
    return out.reshape(n, oc, h, w)


if __name__ == "__main__":
    # Small shapes consistent with convDU4 (scaled-down channel counts).
    N, C_IN, C_OUT, H, W = 2, 1024, 256, 16, 16
    KH, KW = 9, 1

    key = jax.random.PRNGKey(0)
    kx, kwt, kb = jax.random.split(key, 3)

    fea = jax.random.normal(kx, (N, C_IN, H, W), dtype=jnp.float32)
    bound = 1.0 / (C_IN * KH * KW) ** 0.5
    conv_w = jax.random.uniform(kwt, (C_OUT, C_IN, KH, KW),
                                minval=-bound, maxval=bound, dtype=jnp.float32)
    conv_b = jax.random.uniform(kb, (C_OUT,),
                                minval=-bound, maxval=bound, dtype=jnp.float32)

    w_eff, b_col = prepare_params(conv_w, conv_b)       # one-time, outside hot path
    out = jax.block_until_ready(convdu4_forward(fea, w_eff, b_col))
    assert out.shape == (N, C_OUT, H, W)

    # Reference (module semantics): per-row Conv2d((9,1), pad (4,0)) + LeakyReLU(0.2)
    # collapses to a centre-tap pointwise conv.
    w_c = conv_w[:, :, KH // 2, 0]                      # (C_OUT, C_IN)
    z_ref = jnp.einsum("oc,nchw->nohw", w_c, fea,
                       precision=jax.lax.Precision.HIGHEST) + conv_b[None, :, None, None]
    ref = jnp.maximum(z_ref, 0.2 * z_ref)
    assert jnp.allclose(out, ref, atol=3e-2, rtol=3e-2)   # loose: kernel uses bf16 MXU

    # Tight check against a reference with the same bf16 input rounding as the MXU.
    z_bf = jnp.einsum("oc,nchw->nohw",
                      w_c.astype(jnp.bfloat16).astype(jnp.float32),
                      fea.astype(jnp.bfloat16).astype(jnp.float32),
                      precision=jax.lax.Precision.HIGHEST) + conv_b[None, :, None, None]
    ref_bf = jnp.maximum(z_bf, 0.2 * z_bf)
    assert jnp.allclose(out, ref_bf, atol=2e-3, rtol=2e-3)

    # Also exercise the tiled-K fallback path (used only for very large C in practice).
    out_tiled = jax.block_until_ready(
        convdu4_forward(fea, w_eff, b_col, force_tiled_k=True))
    assert out_tiled.shape == (N, C_OUT, H, W)
    assert jnp.allclose(out_tiled, ref_bf, atol=2e-3, rtol=2e-3)

    print("KERNEL_OK")
</pallas_src>

<mosaic_0001>
module attributes {stable_mosaic.version = 11 : i64} {
  func.func @_convdu4_kernel_1k(%arg0: i32, %arg1: i32, %arg2: i32, %arg3: memref<1x1024x256xf32, #tpu.memory_space<vmem>>, %arg4: memref<256x1024xbf16, #tpu.memory_space<vmem>>, %arg5: memref<256x1xf32, #tpu.memory_space<vmem>>, %arg6: memref<1x256x256xf32, #tpu.memory_space<vmem>>) attributes {dimension_semantics = [#tpu.dimension_semantics<parallel>, #tpu.dimension_semantics<parallel>, #tpu.dimension_semantics<parallel>], iteration_bounds = array<i64: 2, 1, 1>, scalar_prefetch = 0 : i64, scratch_operands = 0 : i64, tpu.core_type = #tpu.core_type<tc>, window_params = [{transform_indices = @transform_0, window_bounds = array<i64: 1, 1024, 256>}, {transform_indices = @transform_1, window_bounds = array<i64: 256, 1024>}, {transform_indices = @transform_2, window_bounds = array<i64: 256, 1>}, {transform_indices = @transform_3, window_bounds = array<i64: 1, 256, 256>}]} {
    %c0 = arith.constant 0 : index
    %c0_0 = arith.constant 0 : index
    %0 = vector.load %arg4[%c0, %c0_0] : memref<256x1024xbf16, #tpu.memory_space<vmem>>, vector<256x1024xbf16>
    %c0_1 = arith.constant 0 : index
    %c0_2 = arith.constant 0 : index
    %c0_3 = arith.constant 0 : index
    %1 = vector.load %arg3[%c0_1, %c0_2, %c0_3] : memref<1x1024x256xf32, #tpu.memory_space<vmem>>, vector<1x1024x256xf32>
    %2 = vector.shape_cast %1 : vector<1x1024x256xf32> to vector<1024x256xf32>
    %3 = arith.truncf %2 : vector<1024x256xf32> to vector<1024x256xbf16>
    %cst = arith.constant dense<0.000000e+00> : vector<256x256xf32>
    %4 = tpu.matmul %0, %3, %cst {dimension_numbers = #tpu.dot_dimension_numbers<[1], [0], [0], [1], [0, 0, 1, 1], [], []>} : vector<256x1024xbf16>, vector<1024x256xbf16>, vector<256x256xf32> -> vector<256x256xf32>
    %c0_4 = arith.constant 0 : index
    %c0_5 = arith.constant 0 : index
    %5 = vector.load %arg5[%c0_4, %c0_5] : memref<256x1xf32, #tpu.memory_space<vmem>>, vector<256x1xf32>
    %6 = vector.broadcast %5 : vector<256x1xf32> to vector<256x256xf32>
    %7 = arith.addf %4, %6 : vector<256x256xf32>
    %cst_6 = arith.constant 2.000000e-01 : f32
    %8 = vector.broadcast %cst_6 : f32 to vector<256x256xf32>
    %9 = arith.mulf %8, %7 : vector<256x256xf32>
    %10 = arith.maximumf %7, %9 : vector<256x256xf32>
    %c0_7 = arith.constant 0 : index
    %c0_8 = arith.constant 0 : index
    %c0_9 = arith.constant 0 : index
    %11 = vector.load %arg6[%c0_7, %c0_8, %c0_9] : memref<1x256x256xf32, #tpu.memory_space<vmem>>, vector<1x256x256xf32>
    %12 = vector.shape_cast %11 : vector<1x256x256xf32> to vector<256x256xf32>
    %13 = vector.shape_cast %10 : vector<256x256xf32> to vector<1x256x256xf32>
    tpu.vector_store %arg6[%c0_7, %c0_8, %c0_9], %13 {strides = array<i32>} : memref<1x256x256xf32, #tpu.memory_space<vmem>>, vector<1x256x256xf32>,
    return
  }
  func.func @transform_0(%arg0: i32, %arg1: i32, %arg2: i32) -> (i32, i32, i32) {
    %c0_i32 = arith.constant 0 : i32
    %c0_i32_0 = arith.constant 0 : i32
    return %arg0, %c0_i32, %arg1 : i32, i32, i32
  }
  func.func @transform_1(%arg0: i32, %arg1: i32, %arg2: i32) -> (i32, i32) {
    %c0_i32 = arith.constant 0 : i32
    %c0_i32_0 = arith.constant 0 : i32
    return %arg2, %c0_i32 : i32, i32
  }
  func.func @transform_2(%arg0: i32, %arg1: i32, %arg2: i32) -> (i32, i32) {
    %c0_i32 = arith.constant 0 : i32
    %c0_i32_0 = arith.constant 0 : i32
    return %arg2, %c0_i32 : i32, i32
  }
  func.func @transform_3(%arg0: i32, %arg1: i32, %arg2: i32) -> (i32, i32, i32) {
    %c0_i32 = arith.constant 0 : i32
    return %arg0, %arg2, %arg1 : i32, i32, i32
  }
}

</mosaic_0001>

<llo_original>
// kernel: convdu4_forward.1
$region0: #{convdu4_forward.1}
  #allocation0 [shape = 'u32[]', space=smem, size = 0x4, offset = 0x4, fixed_abs, tag = 'smem constant byte address 0x4 - core index']
  #allocation1 [shape = 'u32[144,128]{1,0:T(1,128)}', space=vmem, size = 0x12000, scoped, tag = 'internal scratch']
  %s0 = inlined_call_operand.vmem [shape: f32[2,1024,256], index: 0, kind: input, shape index: {}]
  %s1 = inlined_call_operand.vmem [shape: bf16[256,1024], index: 1, kind: input, shape index: {}]
  %s2 = inlined_call_operand.vmem [shape: f32[256,1], index: 2, kind: input, shape index: {}]
  %s3 = inlined_call_operand.vmem [shape: f32[2,256,256], index: 3, kind: output, shape index: {}]
  %s4 = sld [smem:[#allocation0]]
  $region45: #{convdu4_forward.1} parent=0
    _
  %s6 = ssub.s32 1, %s4
  %s7 = scalar_select 0, %s6, %s4
  loop: start=0, step=1, limit=4
  $region2: #{convdu4_forward.1} parent=0 // loop_pre_header
    _
  $region3: #{convdu4_forward.1} parent=0 // loop_header
    %s9 = sphi 0, %s13
    %p10 = scmp.ge.s32.totalorder %s9, 4
    %s16 = sphi 0, %s35
    %s17 = sphi 0, %s31
    %s18 = sphi 0, %s27
    %s19 = sphi 0, %s16
    %s20 = sphi 0, %s17
    %s21 = sphi 0, %s18
    %s22 = sphi 0, %s19
    %s23 = sphi 0, %s20
    %s24 = sphi 0, %s21
    %s40 = sphi 0, %s42
    %s43 = sphi 0, %s40
    %s44 = sphi 0, %s43
    %s60 = sphi 0, %s44
    %s66 = sphi 0, %s68
    %s69 = sphi 0, %s66
    %s70 = sphi 0, %s69
    %s86 = sphi 0, %s70
    %s92 = sphi 0, %s94
    %s95 = sphi 0, %s92
    %s96 = sphi 0, %s95
    %s112 = sphi 0, %s96
    %s122 = sphi 0, %s124
    %s125 = sphi 0, %s122
    %s126 = sphi 0, %s125
    %s142 = sphi 0, %s126
  $region4: #{convdu4_forward.1} parent=0 // loop_header_branch
    %12 = sbr.rel (%p10) target = $region8
  $region5: #{convdu4_forward.1} parent=0 // loop_body
    %s14 = ssub.s32 %s9, 1
    %s15 = ssub.s32 %s9, 2
    %s25 = sadd.s32 1, %s18
    %p26 = scmp.ge.s32.totalorder %s25, 1
    %s27 = scalar_select %p26, 0, %s25
    %s28 = sadd.s32 1, %s17
    %s29 = scalar_select %p26, %s28, %s17
    %p30 = scmp.ge.s32.totalorder %s29, 1
    %s31 = scalar_select %p30, 0, %s29
    %s32 = sadd.s32 1, %s16
    %s33 = scalar_select %p30, %s32, %s16
    %p34 = scmp.ge.s32.totalorder %s33, 2
    %s35 = scalar_select %p34, 0, %s33
    %s36 = ssub.s32 %s16, %s35
    %s37 = ssub.s32 %s17, %s31
    %s38 = sor.u32 %s36, %s37
    %p39 = scmp.eq.s32.totalorder %s38, 0
    %s41 = sadd.s32 %s40, 1
    %s42 = scalar_select %p39, %s40, %s41
    %p45 = pneg %p39
    %p46 = scmp.eq.s32.totalorder %s9, 1
    %p47 = por %p45, %p46
    %p48 = scmp.ne.s32.totalorder %s40, %s43
    %p49 = scmp.eq.s32.totalorder %s9, 0
    %p50 = por %p48, %p49
    %p51 = scmp.ne.s32.totalorder %s40, %s43
    %p52 = scmp.eq.s32.totalorder %s14, 1
    %p53 = por %p51, %p52
    %p54 = scmp.ne.s32.totalorder %s43, %s44
    %p55 = scmp.eq.s32.totalorder %s14, 0
    %p56 = por %p54, %p55
    %p57 = scmp.ne.s32.totalorder %s43, %s44
    %p58 = scmp.eq.s32.totalorder %s15, 1
    %p59 = por %p57, %p58
    %p61 = scmp.ne.s32.totalorder %s44, %s60
    %p62 = scmp.eq.s32.totalorder %s15, 0
    %p63 = por %p61, %p62
    %s64 = ssub.s32 %s18, %s27
    %p65 = scmp.eq.s32.totalorder %s64, 0
    %s67 = sadd.s32 %s66, 1
    %s68 = scalar_select %p65, %s66, %s67
    %p71 = pneg %p65
    %p72 = scmp.eq.s32.totalorder %s9, 1
    %p73 = por %p71, %p72
    %p74 = scmp.ne.s32.totalorder %s66, %s69
    %p75 = scmp.eq.s32.totalorder %s9, 0
    %p76 = por %p74, %p75
    %p77 = scmp.ne.s32.totalorder %s66, %s69
    %p78 = scmp.eq.s32.totalorder %s14, 1
    %p79 = por %p77, %p78
    %p80 = scmp.ne.s32.totalorder %s69, %s70
    %p81 = scmp.eq.s32.totalorder %s14, 0
    %p82 = por %p80, %p81
    %p83 = scmp.ne.s32.totalorder %s69, %s70
    %p84 = scmp.eq.s32.totalorder %s15, 1
    %p85 = por %p83, %p84
    %p87 = scmp.ne.s32.totalorder %s70, %s86
    %p88 = scmp.eq.s32.totalorder %s15, 0
    %p89 = por %p87, %p88
    %s90 = ssub.s32 %s18, %s27
    %p91 = scmp.eq.s32.totalorder %s90, 0
    %s93 = sadd.s32 %s92, 1
    %s94 = scalar_select %p91, %s92, %s93
    %p97 = pneg %p91
    %p98 = scmp.eq.s32.totalorder %s9, 1
    %p99 = por %p97, %p98
    %p100 = scmp.ne.s32.totalorder %s92, %s95
    %p101 = scmp.eq.s32.totalorder %s9, 0
    %p102 = por %p100, %p101
    %p103 = scmp.ne.s32.totalorder %s92, %s95
    %p104 = scmp.eq.s32.totalorder %s14, 1
    %p105 = por %p103, %p104
    %p106 = scmp.ne.s32.totalorder %s95, %s96
    %p107 = scmp.eq.s32.totalorder %s14, 0
    %p108 = por %p106, %p107
    %p109 = scmp.ne.s32.totalorder %s95, %s96
    %p110 = scmp.eq.s32.totalorder %s15, 1
    %p111 = por %p109, %p110
    %p113 = scmp.ne.s32.totalorder %s96, %s112
    %p114 = scmp.eq.s32.totalorder %s15, 0
    %p115 = por %p113, %p114
    %s116 = ssub.s32 %s16, %s35
    %s117 = ssub.s32 %s18, %s27
    %s118 = sor.u32 %s116, %s117
    %s119 = ssub.s32 %s17, %s31
    %s120 = sor.u32 %s118, %s119
    %p121 = scmp.eq.s32.totalorder %s120, 0
    %s123 = sadd.s32 %s122, 1
    %s124 = scalar_select %p121, %s122, %s123
    %p127 = pneg %p121
    %p128 = scmp.eq.s32.totalorder %s9, 1
    %p129 = por %p127, %p128
    %p130 = scmp.ne.s32.totalorder %s122, %s125
    %p131 = scmp.eq.s32.totalorder %s9, 0
    %p132 = por %p130, %p131
    %p133 = scmp.ne.s32.totalorder %s122, %s125
    %p134 = scmp.eq.s32.totalorder %s14, 1
    %p135 = por %p133, %p134
    %p136 = scmp.ne.s32.totalorder %s125, %s126
    %p137 = scmp.eq.s32.totalorder %s14, 0
    %p138 = por %p136, %p137
    %p139 = scmp.ne.s32.totalorder %s125, %s126
    %p140 = scmp.eq.s32.totalorder %s15, 1
    %p141 = por %p139, %p140
    %p143 = scmp.ne.s32.totalorder %s126, %s142
    %p144 = scmp.eq.s32.totalorder %s15, 0
    %p145 = por %p143, %p144
    %p146 = scmp.le.s32.totalorder 1, %s9
    %p147 = scmp.lt.s32.totalorder %s9, 3
    %p148 = pnand %p146, %p147
    %p149 = pneg %p148
    // Predicated region
    $region9: #{convdu4_forward.1} parent=5 // pred_check
      _
    $region10: #{convdu4_forward.1} parent=5 // pred_check_branch
      %151 = sbr.rel (%p148) target = $region12
    $region11: #{convdu4_forward.1} parent=5 // pred_region
      %s152 = ssub.s32 %s9, 1
      // Predicated region
      $region13: #{convdu4_forward.1} parent=11 // pred_check
        %p153 = pneg %p82
      $region14: #{convdu4_forward.1} parent=11 // pred_check_branch
        %155 = sbr.rel (%p153) target = $region16
      $region15: #{convdu4_forward.1} parent=11 // pred_region
        %s156 = smul.u32 32, %s21
        %p157 = scmp.lt.s32.totalorder %s156, 31
        %s158 = scalar_select %p157, %s156, 31
        %s159 = smul.addr %s158, 8
        %s160 = smul.addr %s159, 4
        %s161 = scalar_lea.vmem %s1, %s160
        %s162 = smul.u32 32, %s21
      $region16: #{convdu4_forward.1} parent=11 // pred_fallthru
        _
      // Predicated region
      $region17: #{convdu4_forward.1} parent=11 // pred_check
        %p163 = pneg %p108
      $region18: #{convdu4_forward.1} parent=11 // pred_check_branch
        %165 = sbr.rel (%p163) target = $region20
      $region19: #{convdu4_forward.1} parent=11 // pred_region
        %s166 = smul.u32 32, %s21
        %p167 = scmp.lt.s32.totalorder %s166, 31
        %s168 = scalar_select %p167, %s166, 31
        %s169 = smul.addr %s168, 8
        %s170 = scalar_lea.vmem %s2, %s169
        %s171 = smul.u32 32, %s21
      $region20: #{convdu4_forward.1} parent=11 // pred_fallthru
        _
    $region12: #{convdu4_forward.1} parent=5 // pred_fallthru
      _
    %p172 = scmp.lt.s32.totalorder %s9, 2
    // Predicated region
    $region21: #{convdu4_forward.1} parent=5 // pred_check
      %p173 = pneg %p172
    $region22: #{convdu4_forward.1} parent=5 // pred_check_branch
      %175 = sbr.rel (%p173) target = $region24
    $region23: #{convdu4_forward.1} parent=5 // pred_region
      // Predicated region
      $region25: #{convdu4_forward.1} parent=23 // pred_check
        %p176 = pneg %p50
      $region26: #{convdu4_forward.1} parent=23 // pred_check_branch
        %178 = sbr.rel (%p176) target = $region28
      $region27: #{convdu4_forward.1} parent=23 // pred_region
        %s179 = smul.u32 2, %s17
        %p180 = scmp.lt.s32.totalorder %s16, 1
        %s181 = scalar_select %p180, %s16, 1
        %p182 = scmp.lt.s32.totalorder %s179, 1
        %s183 = scalar_select %p182, %s179, 1
        %s184 = smul.addr %s181, 256
        %s185 = sadd.s32 %s183, %s184
        %s186 = smul.addr %s185, 8
        %s187 = scalar_lea.vmem %s0, %s186
        %s188 = smul.u32 2, %s17
      $region28: #{convdu4_forward.1} parent=23 // pred_fallthru
        _
    $region24: #{convdu4_forward.1} parent=5 // pred_fallthru
      _
    %p189 = scmp.le.s32.totalorder 1, %s9
    %p190 = scmp.lt.s32.totalorder %s9, 3
    %p191 = pnand %p189, %p190
    %p192 = pneg %p191
    // Predicated region
    $region29: #{convdu4_forward.1} parent=5 // pred_check
      _
    $region30: #{convdu4_forward.1} parent=5 // pred_check_branch
      %194 = sbr.rel (%p191) target = $region32
    $region31: #{convdu4_forward.1} parent=5 // pred_region
      %s195 = ssub.s32 %s9, 1
      %s196 = smul.u32 2, %s20
      %p197 = scmp.lt.s32.totalorder %s19, 1
      %s198 = scalar_select %p197, %s19, 1
      %p199 = scmp.lt.s32.totalorder %s196, 1
      %s200 = scalar_select %p199, %s196, 1
      %s201 = smul.addr %s198, 256
      %s202 = sadd.s32 %s200, %s201
      %s203 = smul.addr %s202, 8
      %s204 = scalar_lea.vmem %s0, %s203
      %p205 = pneg %p56
      %p206 = pneg %p53
      %s207 = smul.u32 32, %s21
      %p208 = scmp.lt.s32.totalorder %s207, 31
      %s209 = scalar_select %p208, %s207, 31
      %s210 = smul.addr %s209, 8
      %s211 = smul.addr %s210, 4
      %s212 = scalar_lea.vmem %s1, %s211
      %p213 = pneg %p82
      %p214 = pneg %p79
      %s215 = smul.u32 32, %s21
      %p216 = scmp.lt.s32.totalorder %s215, 31
      %s217 = scalar_select %p216, %s215, 31
      %s218 = smul.addr %s217, 8
      %s219 = scalar_lea.vmem %s2, %s218
      %p220 = pneg %p108
      %p221 = pneg %p105
      %p222 = pneg %p138
      %p223 = pneg %p135
      %s224 = smul.u32 32, %s21
      %s225 = smul.u32 2, %s20
      %p226 = scmp.lt.s32.totalorder %s19, 1
      %s227 = scalar_select %p226, %s19, 1
      %p228 = scmp.lt.s32.totalorder %s224, 31
      %s229 = scalar_select %p228, %s224, 31
      %p230 = scmp.lt.s32.totalorder %s225, 1
      %s231 = scalar_select %p230, %s225, 1
      %s232 = smul.addr %s229, 2
      %s233 = sadd.s32 %s231, %s232
      %s234 = smul.addr %s227, 64
      %s235 = sadd.s32 %s233, %s234
      %s236 = smul.addr %s235, 8
      %s237 = scalar_lea.vmem %s3, %s236
      %s238 = smul.u32 2, %s20
      %p239 = scmp.lt.s32.totalorder %s19, 1
      %s240 = scalar_select %p239, %s19, 1
      %p241 = scmp.lt.s32.totalorder %s238, 1
      %s242 = scalar_select %p241, %s238, 1
      %s243 = smul.addr %s240, 256
      %s244 = sadd.s32 %s242, %s243
      %s245 = smul.addr %s244, 8
      %s246 = scalar_lea.vmem %s0, %s245
      %s247 = smul.u32 2, %s20
      %s248 = smul.u32 32, %s21
      %p249 = scmp.lt.s32.totalorder %s248, 31
      %s250 = scalar_select %p249, %s248, 31
      %s251 = smul.addr %s250, 8
      %s252 = smul.addr %s251, 4
      %s253 = scalar_lea.vmem %s1, %s252
      %s254 = smul.u32 32, %s21
      %s255 = smul.u32 32, %s21
      %p256 = scmp.lt.s32.totalorder %s255, 31
      %s257 = scalar_select %p256, %s255, 31
      %s258 = smul.addr %s257, 8
      %s259 = scalar_lea.vmem %s2, %s258
      %s260 = smul.u32 32, %s21
      %s261 = smul.u32 32, %s21
      %s262 = smul.u32 2, %s20
      %p263 = scmp.lt.s32.totalorder %s19, 1
      %s264 = scalar_select %p263, %s19, 1
      %p265 = scmp.lt.s32.totalorder %s261, 31
      %s266 = scalar_select %p265, %s261, 31
      %p267 = scmp.lt.s32.totalorder %s262, 1
      %s268 = scalar_select %p267, %s262, 1
      %s269 = smul.addr %s266, 2
      %s270 = sadd.s32 %s268, %s269
      %s271 = smul.addr %s264, 64
      %s272 = sadd.s32 %s270, %s271
      %s273 = smul.addr %s272, 8
      %s274 = scalar_lea.vmem %s3, %s273
      %s275 = smul.u32 32, %s21
      %s276 = smul.u32 2, %s20
      %v277 = vld [vmem:[%s253] sm:$0xff]
      %v278 = vld [vmem:[%s253 + $0x8] sm:$0xff]
      %v279 = vld [vmem:[%s253 + $0x10] sm:$0xff]
      %v280 = vld [vmem:[%s253 + $0x18] sm:$0xff]
      %v281 = vld [vmem:[%s253 + $0x20] sm:$0xff]
      %v282 = vld [vmem:[%s253 + $0x28] sm:$0xff]
      %v283 = vld [vmem:[%s253 + $0x30] sm:$0xff]
      %v284 = vld [vmem:[%s253 + $0x38] sm:$0xff]
      %v285 = vld [vmem:[%s253 + $0x40] sm:$0xff]
      %v286 = vld [vmem:[%s253 + $0x48] sm:$0xff]
      %v287 = vld [vmem:[%s253 + $0x50] sm:$0xff]
      %v288 = vld [vmem:[%s253 + $0x58] sm:$0xff]
      %v289 = vld [vmem:[%s253 + $0x60] sm:$0xff]
      %v290 = vld [vmem:[%s253 + $0x68] sm:$0xff]
      %v291 = vld [vmem:[%s253 + $0x70] sm:$0xff]
      %v292 = vld [vmem:[%s253 + $0x78] sm:$0xff]
      %v293 = vld [vmem:[%s253 + $0x80] sm:$0xff]
      %v294 = vld [vmem:[%s253 + $0x88] sm:$0xff]
      %v295 = vld [vmem:[%s253 + $0x90] sm:$0xff]
      %v296 = vld [vmem:[%s253 + $0x98] sm:$0xff]
      %v297 = vld [vmem:[%s253 + $0xa0] sm:$0xff]
      %v298 = vld [vmem:[%s253 + $0xa8] sm:$0xff]
      %v299 = vld [vmem:[%s253 + $0xb0] sm:$0xff]
      %v300 = vld [vmem:[%s253 + $0xb8] sm:$0xff]
      %v301 = vld [vmem:[%s253 + $0xc0] sm:$0xff]
      %v302 = vld [vmem:[%s253 + $0xc8] sm:$0xff]
      %v303 = vld [vmem:[%s253 + $0xd0] sm:$0xff]
      %v304 = vld [vmem:[%s253 + $0xd8] sm:$0xff]
      %v305 = vld [vmem:[%s253 + $0xe0] sm:$0xff]
      %v306 = vld [vmem:[%s253 + $0xe8] sm:$0xff]
      %v307 = vld [vmem:[%s253 + $0xf0] sm:$0xff]
      %v308 = vld [vmem:[%s253 + $0xf8] sm:$0xff]
      %v309 = vld [vmem:[%s253 + $0x100] sm:$0xff]
      %v310 = vld [vmem:[%s253 + $0x108] sm:$0xff]
      %v311 = vld [vmem:[%s253 + $0x110] sm:$0xff]
      %v312 = vld [vmem:[%s253 + $0x118] sm:$0xff]
      %v313 = vld [vmem:[%s253 + $0x120] sm:$0xff]
      %v314 = vld [vmem:[%s253 + $0x128] sm:$0xff]
      %v315 = vld [vmem:[%s253 + $0x130] sm:$0xff]
      %v316 = vld [vmem:[%s253 + $0x138] sm:$0xff]
      %v317 = vld [vmem:[%s253 + $0x140] sm:$0xff]
      %v318 = vld [vmem:[%s253 + $0x148] sm:$0xff]
      %v319 = vld [vmem:[%s253 + $0x150] sm:$0xff]
      %v320 = vld [vmem:[%s253 + $0x158] sm:$0xff]
      %v321 = vld [vmem:[%s253 + $0x160] sm:$0xff]
      %v322 = vld [vmem:[%s253 + $0x168] sm:$0xff]
      %v323 = vld [vmem:[%s253 + $0x170] sm:$0xff]
      %v324 = vld [vmem:[%s253 + $0x178] sm:$0xff]
      %v325 = vld [vmem:[%s253 + $0x180] sm:$0xff]
      %v326 = vld [vmem:[%s253 + $0x188] sm:$0xff]
      %v327 = vld [vmem:[%s253 + $0x190] sm:$0xff]
      %v328 = vld [vmem:[%s253 + $0x198] sm:$0xff]
      %v329 = vld [vmem:[%s253 + $0x1a0] sm:$0xff]
      %v330 = vld [vmem:[%s253 + $0x1a8] sm:$0xff]
      %v331 = vld [vmem:[%s253 + $0x1b0] sm:$0xff]
      %v332 = vld [vmem:[%s253 + $0x1b8] sm:$0xff]
      %v333 = vld [vmem:[%s253 + $0x1c0] sm:$0xff]
      %v334 = vld [vmem:[%s253 + $0x1c8] sm:$0xff]
      %v335 = vld [vmem:[%s253 + $0x1d0] sm:$0xff]
      %v336 = vld [vmem:[%s253 + $0x1d8] sm:$0xff]
      %v337 = vld [vmem:[%s253 + $0x1e0] sm:$0xff]
      %v338 = vld [vmem:[%s253 + $0x1e8] sm:$0xff]
      %v339 = vld [vmem:[%s253 + $0x1f0] sm:$0xff]
      %v340 = vld [vmem:[%s253 + $0x1f8] sm:$0xff]
      %v341 = vld [vmem:[%s253 + $0x200] sm:$0xff]
      %v342 = vld [vmem:[%s253 + $0x208] sm:$0xff]
      %v343 = vld [vmem:[%s253 + $0x210] sm:$0xff]
      %v344 = vld [vmem:[%s253 + $0x218] sm:$0xff]
      %v345 = vld [vmem:[%s253 + $0x220] sm:$0xff]
      %v346 = vld [vmem:[%s253 + $0x228] sm:$0xff]
      %v347 = vld [vmem:[%s253 + $0x230] sm:$0xff]
      %v348 = vld [vmem:[%s253 + $0x238] sm:$0xff]
      %v349 = vld [vmem:[%s253 + $0x240] sm:$0xff]
      %v350 = vld [vmem:[%s253 + $0x248] sm:$0xff]
      %v351 = vld [vmem:[%s253 + $0x250] sm:$0xff]
      %v352 = vld [vmem:[%s253 + $0x258] sm:$0xff]
      %v353 = vld [vmem:[%s253 + $0x260] sm:$0xff]
      %v354 = vld [vmem:[%s253 + $0x268] sm:$0xff]
      %v355 = vld [vmem:[%s253 + $0x270] sm:$0xff]
      %v356 = vld [vmem:[%s253 + $0x278] sm:$0xff]
      %v357 = vld [vmem:[%s253 + $0x280] sm:$0xff]
      %v358 = vld [vmem:[%s253 + $0x288] sm:$0xff]
      %v359 = vld [vmem:[%s253 + $0x290] sm:$0xff]
      %v360 = vld [vmem:[%s253 + $0x298] sm:$0xff]
      %v361 = vld [vmem:[%s253 + $0x2a0] sm:$0xff]
      %v362 = vld [vmem:[%s253 + $0x2a8] sm:$0xff]
      %v363 = vld [vmem:[%s253 + $0x2b0] sm:$0xff]
      %v364 = vld [vmem:[%s253 + $0x2b8] sm:$0xff]
      %v365 = vld [vmem:[%s253 + $0x2c0] sm:$0xff]
      %v366 = vld [vmem:[%s253 + $0x2c8] sm:$0xff]
      %v367 = vld [vmem:[%s253 + $0x2d0] sm:$0xff]
      %v368 = vld [vmem:[%s253 + $0x2d8] sm:$0xff]
      %v369 = vld [vmem:[%s253 + $0x2e0] sm:$0xff]
      %v370 = vld [vmem:[%s253 + $0x2e8] sm:$0xff]
      %v371 = vld [vmem:[%s253 + $0x2f0] sm:$0xff]
      %v372 = vld [vmem:[%s253 + $0x2f8] sm:$0xff]
      %v373 = vld [vmem:[%s253 + $0x300] sm:$0xff]
      %v374 = vld [vmem:[%s253 + $0x308] sm:$0xff]
      %v375 = vld [vmem:[%s253 + $0x310] sm:$0xff]
      %v376 = vld [vmem:[%s253 + $0x318] sm:$0xff]
      %v377 = vld [vmem:[%s253 + $0x320] sm:$0xff]
      %v378 = vld [vmem:[%s253 + $0x328] sm:$0xff]
      %v379 = vld [vmem:[%s253 + $0x330] sm:$0xff]
      %v380 = vld [vmem:[%s253 + $0x338] sm:$0xff]
      %v381 = vld [vmem:[%s253 + $0x340] sm:$0xff]
      %v382 = vld [vmem:[%s253 + $0x348] sm:$0xff]
      %v383 = vld [vmem:[%s253 + $0x350] sm:$0xff]
      %v384 = vld [vmem:[%s253 + $0x358] sm:$0xff]
      %v385 = vld [vmem:[%s253 + $0x360] sm:$0xff]
      %v386 = vld [vmem:[%s253 + $0x368] sm:$0xff]
      %v387 = vld [vmem:[%s253 + $0x370] sm:$0xff]
      %v388 = vld [vmem:[%s253 + $0x378] sm:$0xff]
      %v389 = vld [vmem:[%s253 + $0x380] sm:$0xff]
      %v390 = vld [vmem:[%s253 + $0x388] sm:$0xff]
      %v391 = vld [vmem:[%s253 + $0x390] sm:$0xff]
      %v392 = vld [vmem:[%s253 + $0x398] sm:$0xff]
      %v393 = vld [vmem:[%s253 + $0x3a0] sm:$0xff]
      %v394 = vld [vmem:[%s253 + $0x3a8] sm:$0xff]
      %v395 = vld [vmem:[%s253 + $0x3b0] sm:$0xff]
      %v396 = vld [vmem:[%s253 + $0x3b8] sm:$0xff]
      %v397 = vld [vmem:[%s253 + $0x3c0] sm:$0xff]
      %v398 = vld [vmem:[%s253 + $0x3c8] sm:$0xff]
      %v399 = vld [vmem:[%s253 + $0x3d0] sm:$0xff]
      %v400 = vld [vmem:[%s253 + $0x3d8] sm:$0xff]
      %v401 = vld [vmem:[%s253 + $0x3e0] sm:$0xff]
      %v402 = vld [vmem:[%s253 + $0x3e8] sm:$0xff]
      %v403 = vld [vmem:[%s253 + $0x3f0] sm:$0xff]
      %v404 = vld [vmem:[%s253 + $0x3f8] sm:$0xff]
      %v405 = vld [vmem:[%s246] sm:$0xff]
      %v406 = vld [vmem:[%s246 + $0x8] sm:$0xff]
      %v407 = vld [vmem:[%s246 + $0x10] sm:$0xff]
      %v408 = vld [vmem:[%s246 + $0x18] sm:$0xff]
      %v409 = vld [vmem:[%s246 + $0x20] sm:$0xff]
      %v410 = vld [vmem:[%s246 + $0x28] sm:$0xff]
      %v411 = vld [vmem:[%s246 + $0x30] sm:$0xff]
      %v412 = vld [vmem:[%s246 + $0x38] sm:$0xff]
      %v413 = vld [vmem:[%s246 + $0x40] sm:$0xff]
      %v414 = vld [vmem:[%s246 + $0x48] sm:$0xff]
      %v415 = vld [vmem:[%s246 + $0x50] sm:$0xff]
      %v416 = vld [vmem:[%s246 + $0x58] sm:$0xff]
      %v417 = vld [vmem:[%s246 + $0x60] sm:$0xff]
      %v418 = vld [vmem:[%s246 + $0x68] sm:$0xff]
      %v419 = vld [vmem:[%s246 + $0x70] sm:$0xff]
      %v420 = vld [vmem:[%s246 + $0x78] sm:$0xff]
      %v421 = vld [vmem:[%s246 + $0x80] sm:$0xff]
      %v422 = vld [vmem:[%s246 + $0x88] sm:$0xff]
      %v423 = vld [vmem:[%s246 + $0x90] sm:$0xff]
      %v424 = vld [vmem:[%s246 + $0x98] sm:$0xff]
      %v425 = vld [vmem:[%s246 + $0xa0] sm:$0xff]
      %v426 = vld [vmem:[%s246 + $0xa8] sm:$0xff]
      %v427 = vld [vmem:[%s246 + $0xb0] sm:$0xff]
      %v428 = vld [vmem:[%s246 + $0xb8] sm:$0xff]
      %v429 = vld [vmem:[%s246 + $0xc0] sm:$0xff]
      %v430 = vld [vmem:[%s246 + $0xc8] sm:$0xff]
      %v431 = vld [vmem:[%s246 + $0xd0] sm:$0xff]
      %v432 = vld [vmem:[%s246 + $0xd8] sm:$0xff]
      %v433 = vld [vmem:[%s246 + $0xe0] sm:$0xff]
      %v434 = vld [vmem:[%s246 + $0xe8] sm:$0xff]
      %v435 = vld [vmem:[%s246 + $0xf0] sm:$0xff]
      %v436 = vld [vmem:[%s246 + $0xf8] sm:$0xff]
      %v437 = vld [vmem:[%s246 + $0x100] sm:$0xff]
      %v438 = vld [vmem:[%s246 + $0x108] sm:$0xff]
      %v439 = vld [vmem:[%s246 + $0x110] sm:$0xff]
      %v440 = vld [vmem:[%s246 + $0x118] sm:$0xff]
      %v441 = vld [vmem:[%s246 + $0x120] sm:$0xff]
      %v442 = vld [vmem:[%s246 + $0x128] sm:$0xff]
      %v443 = vld [vmem:[%s246 + $0x130] sm:$0xff]
      %v444 = vld [vmem:[%s246 + $0x138] sm:$0xff]
      %v445 = vld [vmem:[%s246 + $0x140] sm:$0xff]
      %v446 = vld [vmem:[%s246 + $0x148] sm:$0xff]
      %v447 = vld [vmem:[%s246 + $0x150] sm:$0xff]
      %v448 = vld [vmem:[%s246 + $0x158] sm:$0xff]
      %v449 = vld [vmem:[%s246 + $0x160] sm:$0xff]
      %v450 = vld [vmem:[%s246 + $0x168] sm:$0xff]
      %v451 = vld [vmem:[%s246 + $0x170] sm:$0xff]
      %v452 = vld [vmem:[%s246 + $0x178] sm:$0xff]
      %v453 = vld [vmem:[%s246 + $0x180] sm:$0xff]
      %v454 = vld [vmem:[%s246 + $0x188] sm:$0xff]
      %v455 = vld [vmem:[%s246 + $0x190] sm:$0xff]
      %v456 = vld [vmem:[%s246 + $0x198] sm:$0xff]
      %v457 = vld [vmem:[%s246 + $0x1a0] sm:$0xff]
      %v458 = vld [vmem:[%s246 + $0x1a8] sm:$0xff]
      %v459 = vld [vmem:[%s246 + $0x1b0] sm:$0xff]
      %v460 = vld [vmem:[%s246 + $0x1b8] sm:$0xff]
      %v461 = vld [vmem:[%s246 + $0x1c0] sm:$0xff]
      %v462 = vld [vmem:[%s246 + $0x1c8] sm:$0xff]
      %v463 = vld [vmem:[%s246 + $0x1d0] sm:$0xff]
      %v464 = vld [vmem:[%s246 + $0x1d8] sm:$0xff]
      %v465 = vld [vmem:[%s246 + $0x1e0] sm:$0xff]
      %v466 = vld [vmem:[%s246 + $0x1e8] sm:$0xff]
      %v467 = vld [vmem:[%s246 + $0x1f0] sm:$0xff]
      %v468 = vld [vmem:[%s246 + $0x1f8] sm:$0xff]
      %v469 = vld [vmem:[%s246 + $0x200] sm:$0xff]
      %v470 = vld [vmem:[%s246 + $0x208] sm:$0xff]
      %v471 = vld [vmem:[%s246 + $0x210] sm:$0xff]
      %v472 = vld [vmem:[%s246 + $0x218] sm:$0xff]
      %v473 = vld [vmem:[%s246 + $0x220] sm:$0xff]
      %v474 = vld [vmem:[%s246 + $0x228] sm:$0xff]
      %v475 = vld [vmem:[%s246 + $0x230] sm:$0xff]
      %v476 = vld [vmem:[%s246 + $0x238] sm:$0xff]
      %v477 = vld [vmem:[%s246 + $0x240] sm:$0xff]
      %v478 = vld [vmem:[%s246 + $0x248] sm:$0xff]
      %v479 = vld [vmem:[%s246 + $0x250] sm:$0xff]
      %v480 = vld [vmem:[%s246 + $0x258] sm:$0xff]
      %v481 = vld [vmem:[%s246 + $0x260] sm:$0xff]
      %v482 = vld [vmem:[%s246 + $0x268] sm:$0xff]
      %v483 = vld [vmem:[%s246 + $0x270] sm:$0xff]
      %v484 = vld [vmem:[%s246 + $0x278] sm:$0xff]
      %v485 = vld [vmem:[%s246 + $0x280] sm:$0xff]
      %v486 = vld [vmem:[%s246 + $0x288] sm:$0xff]
      %v487 = vld [vmem:[%s246 + $0x290] sm:$0xff]
      %v488 = vld [vmem:[%s246 + $0x298] sm:$0xff]
      %v489 = vld [vmem:[%s246 + $0x2a0] sm:$0xff]
      %v490 = vld [vmem:[%s246 + $0x2a8] sm:$0xff]
      %v491 = vld [vmem:[%s246 + $0x2b0] sm:$0xff]
      %v492 = vld [vmem:[%s246 + $0x2b8] sm:$0xff]
      %v493 = vld [vmem:[%s246 + $0x2c0] sm:$0xff]
      %v494 = vld [vmem:[%s246 + $0x2c8] sm:$0xff]
      %v495 = vld [vmem:[%s246 + $0x2d0] sm:$0xff]
      %v496 = vld [vmem:[%s246 + $0x2d8] sm:$0xff]
      %v497 = vld [vmem:[%s246 + $0x2e0] sm:$0xff]
      %v498 = vld [vmem:[%s246 + $0x2e8] sm:$0xff]
      %v499 = vld [vmem:[%s246 + $0x2f0] sm:$0xff]
      %v500 = vld [vmem:[%s246 + $0x2f8] sm:$0xff]
      %v501 = vld [vmem:[%s246 + $0x300] sm:$0xff]
      %v502 = vld [vmem:[%s246 + $0x308] sm:$0xff]
      %v503 = vld [vmem:[%s246 + $0x310] sm:$0xff]
      %v504 = vld [vmem:[%s246 + $0x318] sm:$0xff]
      %v505 = vld [vmem:[%s246 + $0x320] sm:$0xff]
      %v506 = vld [vmem:[%s246 + $0x328] sm:$0xff]
      %v507 = vld [vmem:[%s246 + $0x330] sm:$0xff]
      %v508 = vld [vmem:[%s246 + $0x338] sm:$0xff]
      %v509 = vld [vmem:[%s246 + $0x340] sm:$0xff]
      %v510 = vld [vmem:[%s246 + $0x348] sm:$0xff]
      %v511 = vld [vmem:[%s246 + $0x350] sm:$0xff]
      %v512 = vld [vmem:[%s246 + $0x358] sm:$0xff]
      %v513 = vld [vmem:[%s246 + $0x360] sm:$0xff]
      %v514 = vld [vmem:[%s246 + $0x368] sm:$0xff]
      %v515 = vld [vmem:[%s246 + $0x370] sm:$0xff]
      %v516 = vld [vmem:[%s246 + $0x378] sm:$0xff]
      %v517 = vld [vmem:[%s246 + $0x380] sm:$0xff]
      %v518 = vld [vmem:[%s246 + $0x388] sm:$0xff]
      %v519 = vld [vmem:[%s246 + $0x390] sm:$0xff]
      %v520 = vld [vmem:[%s246 + $0x398] sm:$0xff]
      %v521 = vld [vmem:[%s246 + $0x3a0] sm:$0xff]
      %v522 = vld [vmem:[%s246 + $0x3a8] sm:$0xff]
      %v523 = vld [vmem:[%s246 + $0x3b0] sm:$0xff]
      %v524 = vld [vmem:[%s246 + $0x3b8] sm:$0xff]
      %v525 = vld [vmem:[%s246 + $0x3c0] sm:$0xff]
      %v526 = vld [vmem:[%s246 + $0x3c8] sm:$0xff]
      %v527 = vld [vmem:[%s246 + $0x3d0] sm:$0xff]
      %v528 = vld [vmem:[%s246 + $0x3d8] sm:$0xff]
      %v529 = vld [vmem:[%s246 + $0x3e0] sm:$0xff]
      %v530 = vld [vmem:[%s246 + $0x3e8] sm:$0xff]
      %v531 = vld [vmem:[%s246 + $0x3f0] sm:$0xff]
      %v532 = vld [vmem:[%s246 + $0x3f8] sm:$0xff]
      %v533 = vld [vmem:[%s246 + $0x400] sm:$0xff]
      %v534 = vld [vmem:[%s246 + $0x408] sm:$0xff]
      %v535 = vld [vmem:[%s246 + $0x410] sm:$0xff]
      %v536 = vld [vmem:[%s246 + $0x418] sm:$0xff]
      %v537 = vld [vmem:[%s246 + $0x420] sm:$0xff]
      %v538 = vld [vmem:[%s246 + $0x428] sm:$0xff]
      %v539 = vld [vmem:[%s246 + $0x430] sm:$0xff]
      %v540 = vld [vmem:[%s246 + $0x438] sm:$0xff]
      %v541 = vld [vmem:[%s246 + $0x440] sm:$0xff]
      %v542 = vld [vmem:[%s246 + $0x448] sm:$0xff]
      %v543 = vld [vmem:[%s246 + $0x450] sm:$0xff]
      %v544 = vld [vmem:[%s246 + $0x458] sm:$0xff]
      %v545 = vld [vmem:[%s246 + $0x460] sm:$0xff]
      %v546 = vld [vmem:[%s246 + $0x468] sm:$0xff]
      %v547 = vld [vmem:[%s246 + $0x470] sm:$0xff]
      %v548 = vld [vmem:[%s246 + $0x478] sm:$0xff]
      %v549 = vld [vmem:[%s246 + $0x480] sm:$0xff]
      %v550 = vld [vmem:[%s246 + $0x488] sm:$0xff]
      %v551 = vld [vmem:[%s246 + $0x490] sm:$0xff]
      %v552 = vld [vmem:[%s246 + $0x498] sm:$0xff]
      %v553 = vld [vmem:[%s246 + $0x4a0] sm:$0xff]
      %v554 = vld [vmem:[%s246 + $0x4a8] sm:$0xff]
      %v555 = vld [vmem:[%s246 + $0x4b0] sm:$0xff]
      %v556 = vld [vmem:[%s246 + $0x4b8] sm:$0xff]
      %v557 = vld [vmem:[%s246 + $0x4c0] sm:$0xff]
      %v558 = vld [vmem:[%s246 + $0x4c8] sm:$0xff]
      %v559 = vld [vmem:[%s246 + $0x4d0] sm:$0xff]
      %v560 = vld [vmem:[%s246 + $0x4d8] sm:$0xff]
      %v561 = vld [vmem:[%s246 + $0x4e0] sm:$0xff]
      %v562 = vld [vmem:[%s246 + $0x4e8] sm:$0xff]
      %v563 = vld [vmem:[%s246 + $0x4f0] sm:$0xff]
      %v564 = vld [vmem:[%s246 + $0x4f8] sm:$0xff]
      %v565 = vld [vmem:[%s246 + $0x500] sm:$0xff]
      %v566 = vld [vmem:[%s246 + $0x508] sm:$0xff]
      %v567 = vld [vmem:[%s246 + $0x510] sm:$0xff]
      %v568 = vld [vmem:[%s246 + $0x518] sm:$0xff]
      %v569 = vld [vmem:[%s246 + $0x520] sm:$0xff]
      %v570 = vld [vmem:[%s246 + $0x528] sm:$0xff]
      %v571 = vld [vmem:[%s246 + $0x530] sm:$0xff]
      %v572 = vld [vmem:[%s246 + $0x538] sm:$0xff]
      %v573 = vld [vmem:[%s246 + $0x540] sm:$0xff]
      %v574 = vld [vmem:[%s246 + $0x548] sm:$0xff]
      %v575 = vld [vmem:[%s246 + $0x550] sm:$0xff]
      %v576 = vld [vmem:[%s246 + $0x558] sm:$0xff]
      %v577 = vld [vmem:[%s246 + $0x560] sm:$0xff]
      %v578 = vld [vmem:[%s246 + $0x568] sm:$0xff]
      %v579 = vld [vmem:[%s246 + $0x570] sm:$0xff]
      %v580 = vld [vmem:[%s246 + $0x578] sm:$0xff]
      %v581 = vld [vmem:[%s246 + $0x580] sm:$0xff]
      %v582 = vld [vmem:[%s246 + $0x588] sm:$0xff]
      %v583 = vld [vmem:[%s246 + $0x590] sm:$0xff]
      %v584 = vld [vmem:[%s246 + $0x598] sm:$0xff]
      %v585 = vld [vmem:[%s246 + $0x5a0] sm:$0xff]
      %v586 = vld [vmem:[%s246 + $0x5a8] sm:$0xff]
      %v587 = vld [vmem:[%s246 + $0x5b0] sm:$0xff]
      %v588 = vld [vmem:[%s246 + $0x5b8] sm:$0xff]
      %v589 = vld [vmem:[%s246 + $0x5c0] sm:$0xff]
      %v590 = vld [vmem:[%s246 + $0x5c8] sm:$0xff]
      %v591 = vld [vmem:[%s246 + $0x5d0] sm:$0xff]
      %v592 = vld [vmem:[%s246 + $0x5d8] sm:$0xff]
      %v593 = vld [vmem:[%s246 + $0x5e0] sm:$0xff]
      %v594 = vld [vmem:[%s246 + $0x5e8] sm:$0xff]
      %v595 = vld [vmem:[%s246 + $0x5f0] sm:$0xff]
      %v596 = vld [vmem:[%s246 + $0x5f8] sm:$0xff]
      %v597 = vld [vmem:[%s246 + $0x600] sm:$0xff]
      %v598 = vld [vmem:[%s246 + $0x608] sm:$0xff]
      %v599 = vld [vmem:[%s246 + $0x610] sm:$0xff]
      %v600 = vld [vmem:[%s246 + $0x618] sm:$0xff]
      %v601 = vld [vmem:[%s246 + $0x620] sm:$0xff]
      %v602 = vld [vmem:[%s246 + $0x628] sm:$0xff]
      %v603 = vld [vmem:[%s246 + $0x630] sm:$0xff]
      %v604 = vld [vmem:[%s246 + $0x638] sm:$0xff]
      %v605 = vld [vmem:[%s246 + $0x640] sm:$0xff]
      %v606 = vld [vmem:[%s246 + $0x648] sm:$0xff]
      %v607 = vld [vmem:[%s246 + $0x650] sm:$0xff]
      %v608 = vld [vmem:[%s246 + $0x658] sm:$0xff]
      %v609 = vld [vmem:[%s246 + $0x660] sm:$0xff]
      %v610 = vld [vmem:[%s246 + $0x668] sm:$0xff]
      %v611 = vld [vmem:[%s246 + $0x670] sm:$0xff]
      %v612 = vld [vmem:[%s246 + $0x678] sm:$0xff]
      %v613 = vld [vmem:[%s246 + $0x680] sm:$0xff]
      %v614 = vld [vmem:[%s246 + $0x688] sm:$0xff]
      %v615 = vld [vmem:[%s246 + $0x690] sm:$0xff]
      %v616 = vld [vmem:[%s246 + $0x698] sm:$0xff]
      %v617 = vld [vmem:[%s246 + $0x6a0] sm:$0xff]
      %v618 = vld [vmem:[%s246 + $0x6a8] sm:$0xff]
      %v619 = vld [vmem:[%s246 + $0x6b0] sm:$0xff]
      %v620 = vld [vmem:[%s246 + $0x6b8] sm:$0xff]
      %v621 = vld [vmem:[%s246 + $0x6c0] sm:$0xff]
      %v622 = vld [vmem:[%s246 + $0x6c8] sm:$0xff]
      %v623 = vld [vmem:[%s246 + $0x6d0] sm:$0xff]
      %v624 = vld [vmem:[%s246 + $0x6d8] sm:$0xff]
      %v625 = vld [vmem:[%s246 + $0x6e0] sm:$0xff]
      %v626 = vld [vmem:[%s246 + $0x6e8] sm:$0xff]
      %v627 = vld [vmem:[%s246 + $0x6f0] sm:$0xff]
      %v628 = vld [vmem:[%s246 + $0x6f8] sm:$0xff]
      %v629 = vld [vmem:[%s246 + $0x700] sm:$0xff]
      %v630 = vld [vmem:[%s246 + $0x708] sm:$0xff]
      %v631 = vld [vmem:[%s246 + $0x710] sm:$0xff]
      %v632 = vld [vmem:[%s246 + $0x718] sm:$0xff]
      %v633 = vld [vmem:[%s246 + $0x720] sm:$0xff]
      %v634 = vld [vmem:[%s246 + $0x728] sm:$0xff]
      %v635 = vld [vmem:[%s246 + $0x730] sm:$0xff]
      %v636 = vld [vmem:[%s246 + $0x738] sm:$0xff]
      %v637 = vld [vmem:[%s246 + $0x740] sm:$0xff]
      %v638 = vld [vmem:[%s246 + $0x748] sm:$0xff]
      %v639 = vld [vmem:[%s246 + $0x750] sm:$0xff]
      %v640 = vld [vmem:[%s246 + $0x758] sm:$0xff]
      %v641 = vld [vmem:[%s246 + $0x760] sm:$0xff]
      %v642 = vld [vmem:[%s246 + $0x768] sm:$0xff]
      %v643 = vld [vmem:[%s246 + $0x770] sm:$0xff]
      %v644 = vld [vmem:[%s246 + $0x778] sm:$0xff]
      %v645 = vld [vmem:[%s246 + $0x780] sm:$0xff]
      %v646 = vld [vmem:[%s246 + $0x788] sm:$0xff]
      %v647 = vld [vmem:[%s246 + $0x790] sm:$0xff]
      %v648 = vld [vmem:[%s246 + $0x798] sm:$0xff]
      %v649 = vld [vmem:[%s246 + $0x7a0] sm:$0xff]
      %v650 = vld [vmem:[%s246 + $0x7a8] sm:$0xff]
      %v651 = vld [vmem:[%s246 + $0x7b0] sm:$0xff]
      %v652 = vld [vmem:[%s246 + $0x7b8] sm:$0xff]
      %v653 = vld [vmem:[%s246 + $0x7c0] sm:$0xff]
      %v654 = vld [vmem:[%s246 + $0x7c8] sm:$0xff]
      %v655 = vld [vmem:[%s246 + $0x7d0] sm:$0xff]
      %v656 = vld [vmem:[%s246 + $0x7d8] sm:$0xff]
      %v657 = vld [vmem:[%s246 + $0x7e0] sm:$0xff]
      %v658 = vld [vmem:[%s246 + $0x7e8] sm:$0xff]
      %v659 = vld [vmem:[%s246 + $0x7f0] sm:$0xff]
      %v660 = vld [vmem:[%s246 + $0x7f8] sm:$0xff]
      %v661 = vpack.c.bf16 %v407, %v405
      %v662 = vpack.c.bf16 %v408, %v406
      %v663 = vpack.c.bf16 %v411, %v409
      %v664 = vpack.c.bf16 %v412, %v410
      %v665 = vpack.c.bf16 %v415, %v413
      %v666 = vpack.c.bf16 %v416, %v414
      %v667 = vpack.c.bf16 %v419, %v417
      %v668 = vpack.c.bf16 %v420, %v418
      %v669 = vpack.c.bf16 %v423, %v421
      %v670 = vpack.c.bf16 %v424, %v422
      %v671 = vpack.c.bf16 %v427, %v425
      %v672 = vpack.c.bf16 %v428, %v426
      %v673 = vpack.c.bf16 %v431, %v429
      %v674 = vpack.c.bf16 %v432, %v430
      %v675 = vpack.c.bf16 %v435, %v433
      %v676 = vpack.c.bf16 %v436, %v434
      %v677 = vpack.c.bf16 %v439, %v437
      %v678 = vpack.c.bf16 %v440, %v438
      %v679 = vpack.c.bf16 %v443, %v441
      %v680 = vpack.c.bf16 %v444, %v442
      %v681 = vpack.c.bf16 %v447, %v445
      %v682 = vpack.c.bf16 %v448, %v446
      %v683 = vpack.c.bf16 %v451, %v449
      %v684 = vpack.c.bf16 %v452, %v450
      %v685 = vpack.c.bf16 %v455, %v453
      %v686 = vpack.c.bf16 %v456, %v454
      %v687 = vpack.c.bf16 %v459, %v457
      %v688 = vpack.c.bf16 %v460, %v458
      %v689 = vpack.c.bf16 %v463, %v461
      %v690 = vpack.c.bf16 %v464, %v462
      %v691 = vpack.c.bf16 %v467, %v465
      %v692 = vpack.c.bf16 %v468, %v466
      %v693 = vpack.c.bf16 %v471, %v469
      %v694 = vpack.c.bf16 %v472, %v470
      %v695 = vpack.c.bf16 %v475, %v473
      %v696 = vpack.c.bf16 %v476, %v474
      %v697 = vpack.c.bf16 %v479, %v477
      %v698 = vpack.c.bf16 %v480, %v478
      %v699 = vpack.c.bf16 %v483, %v481
      %v700 = vpack.c.bf16 %v484, %v482
      %v701 = vpack.c.bf16 %v487, %v485
      %v702 = vpack.c.bf16 %v488, %v486
      %v703 = vpack.c.bf16 %v491, %v489
      %v704 = vpack.c.bf16 %v492, %v490
      %v705 = vpack.c.bf16 %v495, %v493
      %v706 = vpack.c.bf16 %v496, %v494
      %v707 = vpack.c.bf16 %v499, %v497
      %v708 = vpack.c.bf16 %v500, %v498
      %v709 = vpack.c.bf16 %v503, %v501
      %v710 = vpack.c.bf16 %v504, %v502
      %v711 = vpack.c.bf16 %v507, %v505
      %v712 = vpack.c.bf16 %v508, %v506
      %v713 = vpack.c.bf16 %v511, %v509
      %v714 = vpack.c.bf16 %v512, %v510
      %v715 = vpack.c.bf16 %v515, %v513
      %v716 = vpack.c.bf16 %v516, %v514
      %v717 = vpack.c.bf16 %v519, %v517
      %v718 = vpack.c.bf16 %v520, %v518
      %v719 = vpack.c.bf16 %v523, %v521
      %v720 = vpack.c.bf16 %v524, %v522
      %v721 = vpack.c.bf16 %v527, %v525
      %v722 = vpack.c.bf16 %v528, %v526
      %v723 = vpack.c.bf16 %v531, %v529
      %v724 = vpack.c.bf16 %v532, %v530
      %v725 = vpack.c.bf16 %v535, %v533
      %v726 = vpack.c.bf16 %v536, %v534
      %v727 = vpack.c.bf16 %v539, %v537
      %v728 = vpack.c.bf16 %v540, %v538
      %v729 = vpack.c.bf16 %v543, %v541
      %v730 = vpack.c.bf16 %v544, %v542
      %v731 = vpack.c.bf16 %v547, %v545
      %v732 = vpack.c.bf16 %v548, %v546
      %v733 = vpack.c.bf16 %v551, %v549
      %v734 = vpack.c.bf16 %v552, %v550
      %v735 = vpack.c.bf16 %v555, %v553
      %v736 = vpack.c.bf16 %v556, %v554
      %v737 = vpack.c.bf16 %v559, %v557
      %v738 = vpack.c.bf16 %v560, %v558
      %v739 = vpack.c.bf16 %v563, %v561
      %v740 = vpack.c.bf16 %v564, %v562
      %v741 = vpack.c.bf16 %v567, %v565
      %v742 = vpack.c.bf16 %v568, %v566
      %v743 = vpack.c.bf16 %v571, %v569
      %v744 = vpack.c.bf16 %v572, %v570
      %v745 = vpack.c.bf16 %v575, %v573
      %v746 = vpack.c.bf16 %v576, %v574
      %v747 = vpack.c.bf16 %v579, %v577
      %v748 = vpack.c.bf16 %v580, %v578
      %v749 = vpack.c.bf16 %v583, %v581
      %v750 = vpack.c.bf16 %v584, %v582
      %v751 = vpack.c.bf16 %v587, %v585
      %v752 = vpack.c.bf16 %v588, %v586
      %v753 = vpack.c.bf16 %v591, %v589
      %v754 = vpack.c.bf16 %v592, %v590
      %v755 = vpack.c.bf16 %v595, %v593
      %v756 = vpack.c.bf16 %v596, %v594
      %v757 = vpack.c.bf16 %v599, %v597
      %v758 = vpack.c.bf16 %v600, %v598
      %v759 = vpack.c.bf16 %v603, %v601
      %v760 = vpack.c.bf16 %v604, %v602
      %v761 = vpack.c.bf16 %v607, %v605
      %v762 = vpack.c.bf16 %v608, %v606
      %v763 = vpack.c.bf16 %v611, %v609
      %v764 = vpack.c.bf16 %v612, %v610
      %v765 = vpack.c.bf16 %v615, %v613
      %v766 = vpack.c.bf16 %v616, %v614
      %v767 = vpack.c.bf16 %v619, %v617
      %v768 = vpack.c.bf16 %v620, %v618
      %v769 = vpack.c.bf16 %v623, %v621
      %v770 = vpack.c.bf16 %v624, %v622
      %v771 = vpack.c.bf16 %v627, %v625
      %v772 = vpack.c.bf16 %v628, %v626
      %v773 = vpack.c.bf16 %v631, %v629
      %v774 = vpack.c.bf16 %v632, %v630
      %v775 = vpack.c.bf16 %v635, %v633
      %v776 = vpack.c.bf16 %v636, %v634
      %v777 = vpack.c.bf16 %v639, %v637
      %v778 = vpack.c.bf16 %v640, %v638
      %v779 = vpack.c.bf16 %v643, %v641
      %v780 = vpack.c.bf16 %v644, %v642
      %v781 = vpack.c.bf16 %v647, %v645
      %v782 = vpack.c.bf16 %v648, %v646
      %v783 = vpack.c.bf16 %v651, %v649
      %v784 = vpack.c.bf16 %v652, %v650
      %v785 = vpack.c.bf16 %v655, %v653
      %v786 = vpack.c.bf16 %v656, %v654
      %v787 = vpack.c.bf16 %v659, %v657
      %v788 = vpack.c.bf16 %v660, %v658
      %v789 = vld [vmem:[%s259] sm:$0xff]
      %v790 = vld [vmem:[%s259 + $0x8] sm:$0xff]
      %v791 = vld [vmem:[%s259 + $0x10] sm:$0xff]
      %v792 = vld [vmem:[%s259 + $0x18] sm:$0xff]
      %v793 = vld [vmem:[%s259 + $0x20] sm:$0xff]
      %v794 = vld [vmem:[%s259 + $0x28] sm:$0xff]
      %v795 = vld [vmem:[%s259 + $0x30] sm:$0xff]
      %v796 = vld [vmem:[%s259 + $0x38] sm:$0xff]
      %v797 = vld [vmem:[%s259 + $0x40] sm:$0xff]
      %v798 = vld [vmem:[%s259 + $0x48] sm:$0xff]
      %v799 = vld [vmem:[%s259 + $0x50] sm:$0xff]
      %v800 = vld [vmem:[%s259 + $0x58] sm:$0xff]
      %v801 = vld [vmem:[%s259 + $0x60] sm:$0xff]
      %v802 = vld [vmem:[%s259 + $0x68] sm:$0xff]
      %v803 = vld [vmem:[%s259 + $0x70] sm:$0xff]
      %v804 = vld [vmem:[%s259 + $0x78] sm:$0xff]
      %v805 = vld [vmem:[%s259 + $0x80] sm:$0xff]
      %v806 = vld [vmem:[%s259 + $0x88] sm:$0xff]
      %v807 = vld [vmem:[%s259 + $0x90] sm:$0xff]
      %v808 = vld [vmem:[%s259 + $0x98] sm:$0xff]
      %v809 = vld [vmem:[%s259 + $0xa0] sm:$0xff]
      %v810 = vld [vmem:[%s259 + $0xa8] sm:$0xff]
      %v811 = vld [vmem:[%s259 + $0xb0] sm:$0xff]
      %v812 = vld [vmem:[%s259 + $0xb8] sm:$0xff]
      %v813 = vld [vmem:[%s259 + $0xc0] sm:$0xff]
      %v814 = vld [vmem:[%s259 + $0xc8] sm:$0xff]
      %v815 = vld [vmem:[%s259 + $0xd0] sm:$0xff]
      %v816 = vld [vmem:[%s259 + $0xd8] sm:$0xff]
      %v817 = vld [vmem:[%s259 + $0xe0] sm:$0xff]
      %v818 = vld [vmem:[%s259 + $0xe8] sm:$0xff]
      %v819 = vld [vmem:[%s259 + $0xf0] sm:$0xff]
      %v820 = vld [vmem:[%s259 + $0xf8] sm:$0xff]
      %822 = vset.pattern.permute.xlu0 0
      %823 = vperm.xlu0 %822, %v789
      %v824 = vpop.permute.xlu0 %823
      %827 = vset.pattern.permute.xlu0 0
      %828 = vperm.xlu0 %827, %v790
      %v829 = vpop.permute.xlu0 %828
      %832 = vset.pattern.permute.xlu0 0
      %833 = vperm.xlu0 %832, %v791
      %v834 = vpop.permute.xlu0 %833
      %837 = vset.pattern.permute.xlu0 0
      %838 = vperm.xlu0 %837, %v792
      %v839 = vpop.permute.xlu0 %838
      %842 = vset.pattern.permute.xlu0 0
      %843 = vperm.xlu0 %842, %v793
      %v844 = vpop.permute.xlu0 %843
      %847 = vset.pattern.permute.xlu0 0
      %848 = vperm.xlu0 %847, %v794
      %v849 = vpop.permute.xlu0 %848
      %852 = vset.pattern.permute.xlu0 0
      %853 = vperm.xlu0 %852, %v795
      %v854 = vpop.permute.xlu0 %853
      %857 = vset.pattern.permute.xlu0 0
      %858 = vperm.xlu0 %857, %v796
      %v859 = vpop.permute.xlu0 %858
      %862 = vset.pattern.permute.xlu0 0
      %863 = vperm.xlu0 %862, %v797
      %v864 = vpop.permute.xlu0 %863
      %867 = vset.pattern.permute.xlu0 0
      %868 = vperm.xlu0 %867, %v798
      %v869 = vpop.permute.xlu0 %868
      %872 = vset.pattern.permute.xlu0 0
      %873 = vperm.xlu0 %872, %v799
      %v874 = vpop.permute.xlu0 %873
      %877 = vset.pattern.permute.xlu0 0
      %878 = vperm.xlu0 %877, %v800
      %v879 = vpop.permute.xlu0 %878
      %882 = vset.pattern.permute.xlu0 0
      %883 = vperm.xlu0 %882, %v801
      %v884 = vpop.permute.xlu0 %883
      %887 = vset.pattern.permute.xlu0 0
      %888 = vperm.xlu0 %887, %v802
      %v889 = vpop.permute.xlu0 %888
      %892 = vset.pattern.permute.xlu0 0
      %893 = vperm.xlu0 %892, %v803
      %v894 = vpop.permute.xlu0 %893
      %897 = vset.pattern.permute.xlu0 0
      %898 = vperm.xlu0 %897, %v804
      %v899 = vpop.permute.xlu0 %898
      %902 = vset.pattern.permute.xlu0 0
      %903 = vperm.xlu0 %902, %v805
      %v904 = vpop.permute.xlu0 %903
      %907 = vset.pattern.permute.xlu0 0
      %908 = vperm.xlu0 %907, %v806
      %v909 = vpop.permute.xlu0 %908
      %912 = vset.pattern.permute.xlu0 0
      %913 = vperm.xlu0 %912, %v807
      %v914 = vpop.permute.xlu0 %913
      %917 = vset.pattern.permute.xlu0 0
      %918 = vperm.xlu0 %917, %v808
      %v919 = vpop.permute.xlu0 %918
      %922 = vset.pattern.permute.xlu0 0
      %923 = vperm.xlu0 %922, %v809
      %v924 = vpop.permute.xlu0 %923
      %927 = vset.pattern.permute.xlu0 0
      %928 = vperm.xlu0 %927, %v810
      %v929 = vpop.permute.xlu0 %928
      %932 = vset.pattern.permute.xlu0 0
      %933 = vperm.xlu0 %932, %v811
      %v934 = vpop.permute.xlu0 %933
      %937 = vset.pattern.permute.xlu0 0
      %938 = vperm.xlu0 %937, %v812
      %v939 = vpop.permute.xlu0 %938
      %942 = vset.pattern.permute.xlu0 0
      %943 = vperm.xlu0 %942, %v813
      %v944 = vpop.permute.xlu0 %943
      %947 = vset.pattern.permute.xlu0 0
      %948 = vperm.xlu0 %947, %v814
      %v949 = vpop.permute.xlu0 %948
      %952 = vset.pattern.permute.xlu0 0
      %953 = vperm.xlu0 %952, %v815
      %v954 = vpop.permute.xlu0 %953
      %957 = vset.pattern.permute.xlu0 0
      %958 = vperm.xlu0 %957, %v816
      %v959 = vpop.permute.xlu0 %958
      %962 = vset.pattern.permute.xlu0 0
      %963 = vperm.xlu0 %962, %v817
      %v964 = vpop.permute.xlu0 %963
      %967 = vset.pattern.permute.xlu0 0
      %968 = vperm.xlu0 %967, %v818
      %v969 = vpop.permute.xlu0 %968
      %972 = vset.pattern.permute.xlu0 0
      %973 = vperm.xlu0 %972, %v819
      %v974 = vpop.permute.xlu0 %973
      %977 = vset.pattern.permute.xlu0 0
      %978 = vperm.xlu0 %977, %v820
      %v979 = vpop.permute.xlu0 %978
      %v1109 = vunpack.c.l.b16 %v277
      %v1110 = vunpack.c.h.b16 %v277
      %v1111 = vunpack.c.l.b16 %v278
      %v1112 = vunpack.c.h.b16 %v278
      %v1113 = vunpack.c.l.b16 %v279
      %v1114 = vunpack.c.h.b16 %v279
      %v1115 = vunpack.c.l.b16 %v280
      %v1116 = vunpack.c.h.b16 %v280
      %v1117 = vunpack.c.l.b16 %v281
      %v1118 = vunpack.c.h.b16 %v281
      %v1119 = vunpack.c.l.b16 %v282
      %v1120 = vunpack.c.h.b16 %v282
      %v1121 = vunpack.c.l.b16 %v283
      %v1122 = vunpack.c.h.b16 %v283
      %v1123 = vunpack.c.l.b16 %v284
      %v1124 = vunpack.c.h.b16 %v284
      %v1125 = vunpack.c.l.b16 %v285
      %v1126 = vunpack.c.h.b16 %v285
      %v1127 = vunpack.c.l.b16 %v286
      %v1128 = vunpack.c.h.b16 %v286
      %v1129 = vunpack.c.l.b16 %v287
      %v1130 = vunpack.c.h.b16 %v287
      %v1131 = vunpack.c.l.b16 %v288
      %v1132 = vunpack.c.h.b16 %v288
      %v1133 = vunpack.c.l.b16 %v289
      %v1134 = vunpack.c.h.b16 %v289
      %v1135 = vunpack.c.l.b16 %v290
      %v1136 = vunpack.c.h.b16 %v290
      %v1137 = vunpack.c.l.b16 %v291
      %v1138 = vunpack.c.h.b16 %v291
      %v1139 = vunpack.c.l.b16 %v292
      %v1140 = vunpack.c.h.b16 %v292
      %v1141 = vunpack.c.l.b16 %v293
      %v1142 = vunpack.c.h.b16 %v293
      %v1143 = vunpack.c.l.b16 %v294
      %v1144 = vunpack.c.h.b16 %v294
      %v1145 = vunpack.c.l.b16 %v295
      %v1146 = vunpack.c.h.b16 %v295
      %v1147 = vunpack.c.l.b16 %v296
      %v1148 = vunpack.c.h.b16 %v296
      %v1149 = vunpack.c.l.b16 %v297
      %v1150 = vunpack.c.h.b16 %v297
      %v1151 = vunpack.c.l.b16 %v298
      %v1152 = vunpack.c.h.b16 %v298
      %v1153 = vunpack.c.l.b16 %v299
      %v1154 = vunpack.c.h.b16 %v299
      %v1155 = vunpack.c.l.b16 %v300
      %v1156 = vunpack.c.h.b16 %v300
      %v1157 = vunpack.c.l.b16 %v301
      %v1158 = vunpack.c.h.b16 %v301
      %v1159 = vunpack.c.l.b16 %v302
      %v1160 = vunpack.c.h.b16 %v302
      %v1161 = vunpack.c.l.b16 %v303
      %v1162 = vunpack.c.h.b16 %v303
      %v1163 = vunpack.c.l.b16 %v304
      %v1164 = vunpack.c.h.b16 %v304
      %v1165 = vunpack.c.l.b16 %v305
      %v1166 = vunpack.c.h.b16 %v305
      %v1167 = vunpack.c.l.b16 %v306
      %v1168 = vunpack.c.h.b16 %v306
      %v1169 = vunpack.c.l.b16 %v307
      %v1170 = vunpack.c.h.b16 %v307
      %v1171 = vunpack.c.l.b16 %v308
      %v1172 = vunpack.c.h.b16 %v308
      %v1173 = vunpack.c.l.b16 %v309
      %v1174 = vunpack.c.h.b16 %v309
      %v1175 = vunpack.c.l.b16 %v310
      %v1176 = vunpack.c.h.b16 %v310
      %v1177 = vunpack.c.l.b16 %v311
      %v1178 = vunpack.c.h.b16 %v311
      %v1179 = vunpack.c.l.b16 %v312
      %v1180 = vunpack.c.h.b16 %v312
      %v1181 = vunpack.c.l.b16 %v313
      %v1182 = vunpack.c.h.b16 %v313
      %v1183 = vunpack.c.l.b16 %v314
      %v1184 = vunpack.c.h.b16 %v314
      %v1185 = vunpack.c.l.b16 %v315
      %v1186 = vunpack.c.h.b16 %v315
      %v1187 = vunpack.c.l.b16 %v316
      %v1188 = vunpack.c.h.b16 %v316
      %v1189 = vunpack.c.l.b16 %v317
      %v1190 = vunpack.c.h.b16 %v317
      %v1191 = vunpack.c.l.b16 %v318
      %v1192 = vunpack.c.h.b16 %v318
      %v1193 = vunpack.c.l.b16 %v319
      %v1194 = vunpack.c.h.b16 %v319
      %v1195 = vunpack.c.l.b16 %v320
      %v1196 = vunpack.c.h.b16 %v320
      %v1197 = vunpack.c.l.b16 %v321
      %v1198 = vunpack.c.h.b16 %v321
      %v1199 = vunpack.c.l.b16 %v322
      %v1200 = vunpack.c.h.b16 %v322
      %v1201 = vunpack.c.l.b16 %v323
      %v1202 = vunpack.c.h.b16 %v323
      %v1203 = vunpack.c.l.b16 %v324
      %v1204 = vunpack.c.h.b16 %v324
      %v1205 = vunpack.c.l.b16 %v325
      %v1206 = vunpack.c.h.b16 %v325
      %v1207 = vunpack.c.l.b16 %v326
      %v1208 = vunpack.c.h.b16 %v326
      %v1209 = vunpack.c.l.b16 %v327
      %v1210 = vunpack.c.h.b16 %v327
      %v1211 = vunpack.c.l.b16 %v328
      %v1212 = vunpack.c.h.b16 %v328
      %v1213 = vunpack.c.l.b16 %v329
      %v1214 = vunpack.c.h.b16 %v329
      %v1215 = vunpack.c.l.b16 %v330
      %v1216 = vunpack.c.h.b16 %v330
      %v1217 = vunpack.c.l.b16 %v331
      %v1218 = vunpack.c.h.b16 %v331
      %v1219 = vunpack.c.l.b16 %v332
      %v1220 = vunpack.c.h.b16 %v332
      %v1221 = vunpack.c.l.b16 %v333
      %v1222 = vunpack.c.h.b16 %v333
      %v1223 = vunpack.c.l.b16 %v334
      %v1224 = vunpack.c.h.b16 %v334
      %v1225 = vunpack.c.l.b16 %v335
      %v1226 = vunpack.c.h.b16 %v335
      %v1227 = vunpack.c.l.b16 %v336
      %v1228 = vunpack.c.h.b16 %v336
      %v1229 = vunpack.c.l.b16 %v337
      %v1230 = vunpack.c.h.b16 %v337
      %v1231 = vunpack.c.l.b16 %v338
      %v1232 = vunpack.c.h.b16 %v338
      %v1233 = vunpack.c.l.b16 %v339
      %v1234 = vunpack.c.h.b16 %v339
      %v1235 = vunpack.c.l.b16 %v340
      %v1236 = vunpack.c.h.b16 %v340
      %v1237 = vunpack.c.l.b16 %v341
      %v1238 = vunpack.c.h.b16 %v341
      %v1239 = vunpack.c.l.b16 %v342
      %v1240 = vunpack.c.h.b16 %v342
      %v1241 = vunpack.c.l.b16 %v343
      %v1242 = vunpack.c.h.b16 %v343
      %v1243 = vunpack.c.l.b16 %v344
      %v1244 = vunpack.c.h.b16 %v344
      %v1245 = vunpack.c.l.b16 %v345
      %v1246 = vunpack.c.h.b16 %v345
      %v1247 = vunpack.c.l.b16 %v346
      %v1248 = vunpack.c.h.b16 %v346
      %v1249 = vunpack.c.l.b16 %v347
      %v1250 = vunpack.c.h.b16 %v347
      %v1251 = vunpack.c.l.b16 %v348
      %v1252 = vunpack.c.h.b16 %v348
      %v1253 = vunpack.c.l.b16 %v349
      %v1254 = vunpack.c.h.b16 %v349
      %v1255 = vunpack.c.l.b16 %v350
      %v1256 = vunpack.c.h.b16 %v350
      %v1257 = vunpack.c.l.b16 %v351
      %v1258 = vunpack.c.h.b16 %v351
      %v1259 = vunpack.c.l.b16 %v352
      %v1260 = vunpack.c.h.b16 %v352
      %v1261 = vunpack.c.l.b16 %v353
      %v1262 = vunpack.c.h.b16 %v353
      %v1263 = vunpack.c.l.b16 %v354
      %v1264 = vunpack.c.h.b16 %v354
      %v1265 = vunpack.c.l.b16 %v355
      %v1266 = vunpack.c.h.b16 %v355
      %v1267 = vunpack.c.l.b16 %v356
      %v1268 = vunpack.c.h.b16 %v356
      %v1269 = vunpack.c.l.b16 %v357
      %v1270 = vunpack.c.h.b16 %v357
      %v1271 = vunpack.c.l.b16 %v358
      %v1272 = vunpack.c.h.b16 %v358
      %v1273 = vunpack.c.l.b16 %v359
      %v1274 = vunpack.c.h.b16 %v359
      %v1275 = vunpack.c.l.b16 %v360
      %v1276 = vunpack.c.h.b16 %v360
      %v1277 = vunpack.c.l.b16 %v361
      %v1278 = vunpack.c.h.b16 %v361
      %v1279 = vunpack.c.l.b16 %v362
      %v1280 = vunpack.c.h.b16 %v362
      %v1281 = vunpack.c.l.b16 %v363
      %v1282 = vunpack.c.h.b16 %v363
      %v1283 = vunpack.c.l.b16 %v364
      %v1284 = vunpack.c.h.b16 %v364
      %v1285 = vunpack.c.l.b16 %v365
      %v1286 = vunpack.c.h.b16 %v365
      %v1287 = vunpack.c.l.b16 %v366
      %v1288 = vunpack.c.h.b16 %v366
      %v1289 = vunpack.c.l.b16 %v367
      %v1290 = vunpack.c.h.b16 %v367
      %v1291 = vunpack.c.l.b16 %v368
      %v1292 = vunpack.c.h.b16 %v368
      %v1293 = vunpack.c.l.b16 %v369
      %v1294 = vunpack.c.h.b16 %v369
      %v1295 = vunpack.c.l.b16 %v370
      %v1296 = vunpack.c.h.b16 %v370
      %v1297 = vunpack.c.l.b16 %v371
      %v1298 = vunpack.c.h.b16 %v371
      %v1299 = vunpack.c.l.b16 %v372
      %v1300 = vunpack.c.h.b16 %v372
      %v1301 = vunpack.c.l.b16 %v373
      %v1302 = vunpack.c.h.b16 %v373
      %v1303 = vunpack.c.l.b16 %v374
      %v1304 = vunpack.c.h.b16 %v374
      %v1305 = vunpack.c.l.b16 %v375
      %v1306 = vunpack.c.h.b16 %v375
      %v1307 = vunpack.c.l.b16 %v376
      %v1308 = vunpack.c.h.b16 %v376
      %v1309 = vunpack.c.l.b16 %v377
      %v1310 = vunpack.c.h.b16 %v377
      %v1311 = vunpack.c.l.b16 %v378
      %v1312 = vunpack.c.h.b16 %v378
      %v1313 = vunpack.c.l.b16 %v379
      %v1314 = vunpack.c.h.b16 %v379
      %v1315 = vunpack.c.l.b16 %v380
      %v1316 = vunpack.c.h.b16 %v380
      %v1317 = vunpack.c.l.b16 %v381
      %v1318 = vunpack.c.h.b16 %v381
      %v1319 = vunpack.c.l.b16 %v382
      %v1320 = vunpack.c.h.b16 %v382
      %v1321 = vunpack.c.l.b16 %v383
      %v1322 = vunpack.c.h.b16 %v383
      %v1323 = vunpack.c.l.b16 %v384
      %v1324 = vunpack.c.h.b16 %v384
      %v1325 = vunpack.c.l.b16 %v385
      %v1326 = vunpack.c.h.b16 %v385
      %v1327 = vunpack.c.l.b16 %v386
      %v1328 = vunpack.c.h.b16 %v386
      %v1329 = vunpack.c.l.b16 %v387
      %v1330 = vunpack.c.h.b16 %v387
      %v1331 = vunpack.c.l.b16 %v388
      %v1332 = vunpack.c.h.b16 %v388
      %v1333 = vunpack.c.l.b16 %v389
      %v1334 = vunpack.c.h.b16 %v389
      %v1335 = vunpack.c.l.b16 %v390
      %v1336 = vunpack.c.h.b16 %v390
      %v1337 = vunpack.c.l.b16 %v391
      %v1338 = vunpack.c.h.b16 %v391
      %v1339 = vunpack.c.l.b16 %v392
      %v1340 = vunpack.c.h.b16 %v392
      %v1341 = vunpack.c.l.b16 %v393
      %v1342 = vunpack.c.h.b16 %v393
      %v1343 = vunpack.c.l.b16 %v394
      %v1344 = vunpack.c.h.b16 %v394
      %v1345 = vunpack.c.l.b16 %v395
      %v1346 = vunpack.c.h.b16 %v395
      %v1347 = vunpack.c.l.b16 %v396
      %v1348 = vunpack.c.h.b16 %v396
      %v1349 = vunpack.c.l.b16 %v397
      %v1350 = vunpack.c.h.b16 %v397
      %v1351 = vunpack.c.l.b16 %v398
      %v1352 = vunpack.c.h.b16 %v398
      %v1353 = vunpack.c.l.b16 %v399
      %v1354 = vunpack.c.h.b16 %v399
      %v1355 = vunpack.c.l.b16 %v400
      %v1356 = vunpack.c.h.b16 %v400
      %v1357 = vunpack.c.l.b16 %v401
      %v1358 = vunpack.c.h.b16 %v401
      %v1359 = vunpack.c.l.b16 %v402
      %v1360 = vunpack.c.h.b16 %v402
      %v1361 = vunpack.c.l.b16 %v403
      %v1362 = vunpack.c.h.b16 %v403
      %v1363 = vunpack.c.l.b16 %v404
      %v1364 = vunpack.c.h.b16 %v404
      %v1365 = vpack.c.b16 %v1117, %v1109
      %v1366 = vpack.c.b16 %v1118, %v1110
      %v1367 = vpack.c.b16 %v1119, %v1111
      %v1368 = vpack.c.b16 %v1120, %v1112
      %v1369 = vpack.c.b16 %v1121, %v1113
      %v1370 = vpack.c.b16 %v1122, %v1114
      %v1371 = vpack.c.b16 %v1123, %v1115
      %v1372 = vpack.c.b16 %v1124, %v1116
      %v1373 = vpack.c.b16 %v1133, %v1125
      %v1374 = vpack.c.b16 %v1134, %v1126
      %v1375 = vpack.c.b16 %v1135, %v1127
      %v1376 = vpack.c.b16 %v1136, %v1128
      %v1377 = vpack.c.b16 %v1137, %v1129
      %v1378 = vpack.c.b16 %v1138, %v1130
      %v1379 = vpack.c.b16 %v1139, %v1131
      %v1380 = vpack.c.b16 %v1140, %v1132
      %v1381 = vpack.c.b16 %v1149, %v1141
      %v1382 = vpack.c.b16 %v1150, %v1142
      %v1383 = vpack.c.b16 %v1151, %v1143
      %v1384 = vpack.c.b16 %v1152, %v1144
      %v1385 = vpack.c.b16 %v1153, %v1145
      %v1386 = vpack.c.b16 %v1154, %v1146
      %v1387 = vpack.c.b16 %v1155, %v1147
      %v1388 = vpack.c.b16 %v1156, %v1148
      %v1389 = vpack.c.b16 %v1165, %v1157
      %v1390 = vpack.c.b16 %v1166, %v1158
      %v1391 = vpack.c.b16 %v1167, %v1159
      %v1392 = vpack.c.b16 %v1168, %v1160
      %v1393 = vpack.c.b16 %v1169, %v1161
      %v1394 = vpack.c.b16 %v1170, %v1162
      %v1395 = vpack.c.b16 %v1171, %v1163
      %v1396 = vpack.c.b16 %v1172, %v1164
      %v1397 = vpack.c.b16 %v1181, %v1173
      %v1398 = vpack.c.b16 %v1182, %v1174
      %v1399 = vpack.c.b16 %v1183, %v1175
      %v1400 = vpack.c.b16 %v1184, %v1176
      %v1401 = vpack.c.b16 %v1185, %v1177
      %v1402 = vpack.c.b16 %v1186, %v1178
      %v1403 = vpack.c.b16 %v1187, %v1179
      %v1404 = vpack.c.b16 %v1188, %v1180
      %v1405 = vpack.c.b16 %v1197, %v1189
      %v1406 = vpack.c.b16 %v1198, %v1190
      %v1407 = vpack.c.b16 %v1199, %v1191
      %v1408 = vpack.c.b16 %v1200, %v1192
      %v1409 = vpack.c.b16 %v1201, %v1193
      %v1410 = vpack.c.b16 %v1202, %v1194
      %v1411 = vpack.c.b16 %v1203, %v1195
      %v1412 = vpack.c.b16 %v1204, %v1196
      %v1413 = vpack.c.b16 %v1213, %v1205
      %v1414 = vpack.c.b16 %v1214, %v1206
      %v1415 = vpack.c.b16 %v1215, %v1207
      %v1416 = vpack.c.b16 %v1216, %v1208
      %v1417 = vpack.c.b16 %v1217, %v1209
      %v1418 = vpack.c.b16 %v1218, %v1210
      %v1419 = vpack.c.b16 %v1219, %v1211
      %v1420 = vpack.c.b16 %v1220, %v1212
      %v1421 = vpack.c.b16 %v1229, %v1221
      %v1422 = vpack.c.b16 %v1230, %v1222
      %v1423 = vpack.c.b16 %v1231, %v1223
      %v1424 = vpack.c.b16 %v1232, %v1224
      %v1425 = vpack.c.b16 %v1233, %v1225
      %v1426 = vpack.c.b16 %v1234, %v1226
      %v1427 = vpack.c.b16 %v1235, %v1227
      %v1428 = vpack.c.b16 %v1236, %v1228
      %v1429 = vpack.c.b16 %v1245, %v1237
      %v1430 = vpack.c.b16 %v1246, %v1238
      %v1431 = vpack.c.b16 %v1247, %v1239
      %v1432 = vpack.c.b16 %v1248, %v1240
      %v1433 = vpack.c.b16 %v1249, %v1241
      %v1434 = vpack.c.b16 %v1250, %v1242
      %v1435 = vpack.c.b16 %v1251, %v1243
      %v1436 = vpack.c.b16 %v1252, %v1244
      %v1437 = vpack.c.b16 %v1261, %v1253
      %v1438 = vpack.c.b16 %v1262, %v1254
      %v1439 = vpack.c.b16 %v1263, %v1255
      %v1440 = vpack.c.b16 %v1264, %v1256
      %v1441 = vpack.c.b16 %v1265, %v1257
      %v1442 = vpack.c.b16 %v1266, %v1258
      %v1443 = vpack.c.b16 %v1267, %v1259
      %v1444 = vpack.c.b16 %v1268, %v1260
      %v1445 = vpack.c.b16 %v1277, %v1269
      %v1446 = vpack.c.b16 %v1278, %v1270
      %v1447 = vpack.c.b16 %v1279, %v1271
      %v1448 = vpack.c.b16 %v1280, %v1272
      %v1449 = vpack.c.b16 %v1281, %v1273
      %v1450 = vpack.c.b16 %v1282, %v1274
      %v1451 = vpack.c.b16 %v1283, %v1275
      %v1452 = vpack.c.b16 %v1284, %v1276
      %v1453 = vpack.c.b16 %v1293, %v1285
      %v1454 = vpack.c.b16 %v1294, %v1286
      %v1455 = vpack.c.b16 %v1295, %v1287
      %v1456 = vpack.c.b16 %v1296, %v1288
      %v1457 = vpack.c.b16 %v1297, %v1289
      %v1458 = vpack.c.b16 %v1298, %v1290
      %v1459 = vpack.c.b16 %v1299, %v1291
      %v1460 = vpack.c.b16 %v1300, %v1292
      %v1461 = vpack.c.b16 %v1309, %v1301
      %v1462 = vpack.c.b16 %v1310, %v1302
      %v1463 = vpack.c.b16 %v1311, %v1303
      %v1464 = vpack.c.b16 %v1312, %v1304
      %v1465 = vpack.c.b16 %v1313, %v1305
      %v1466 = vpack.c.b16 %v1314, %v1306
      %v1467 = vpack.c.b16 %v1315, %v1307
      %v1468 = vpack.c.b16 %v1316, %v1308
      %v1469 = vpack.c.b16 %v1325, %v1317
      %v1470 = vpack.c.b16 %v1326, %v1318
      %v1471 = vpack.c.b16 %v1327, %v1319
      %v1472 = vpack.c.b16 %v1328, %v1320
      %v1473 = vpack.c.b16 %v1329, %v1321
      %v1474 = vpack.c.b16 %v1330, %v1322
      %v1475 = vpack.c.b16 %v1331, %v1323
      %v1476 = vpack.c.b16 %v1332, %v1324
      %v1477 = vpack.c.b16 %v1341, %v1333
      %v1478 = vpack.c.b16 %v1342, %v1334
      %v1479 = vpack.c.b16 %v1343, %v1335
      %v1480 = vpack.c.b16 %v1344, %v1336
      %v1481 = vpack.c.b16 %v1345, %v1337
      %v1482 = vpack.c.b16 %v1346, %v1338
      %v1483 = vpack.c.b16 %v1347, %v1339
      %v1484 = vpack.c.b16 %v1348, %v1340
      %v1485 = vpack.c.b16 %v1357, %v1349
      %v1486 = vpack.c.b16 %v1358, %v1350
      %v1487 = vpack.c.b16 %v1359, %v1351
      %v1488 = vpack.c.b16 %v1360, %v1352
      %v1489 = vpack.c.b16 %v1361, %v1353
      %v1490 = vpack.c.b16 %v1362, %v1354
      %v1491 = vpack.c.b16 %v1363, %v1355
      %v1492 = vpack.c.b16 %v1364, %v1356
      %1621 = vmatprep.subr.bf16.mxu0 %v662
      %1622 = vmatpush1.bf16.msra.mxu0 %v661
      %1623 = vmatprep.subr.bf16.mxu0 %v664
      %1624 = vmatpush1.bf16.msra.mxu0 %v663
      %1625 = vmatprep.subr.bf16.mxu0 %v666
      %1626 = vmatpush1.bf16.msra.mxu0 %v665
      %1627 = vmatprep.subr.bf16.mxu0 %v668
      %1628 = vmatpush1.bf16.msra.mxu0 %v667
      %1629 = vmatprep.subr.bf16.mxu0 %v670
      %1630 = vmatpush1.bf16.msra.mxu0 %v669
      %1631 = vmatprep.subr.bf16.mxu0 %v672
      %1632 = vmatpush1.bf16.msra.mxu0 %v671
      %1633 = vmatprep.subr.bf16.mxu0 %v674
      %1634 = vmatpush1.bf16.msra.mxu0 %v673
      %1635 = vmatprep.subr.bf16.mxu0 %v676
      %1636 = vmatpush1.bf16.msra.mxu0 %v675
      %1637 = vmatprep.subr.bf16.mxu0 %v678
      %1638 = vmatpush1.bf16.msra.mxu0 %v677
      %1639 = vmatprep.subr.bf16.mxu0 %v680
      %1640 = vmatpush1.bf16.msra.mxu0 %v679
      %1641 = vmatprep.subr.bf16.mxu0 %v682
      %1642 = vmatpush1.bf16.msra.mxu0 %v681
      %1643 = vmatprep.subr.bf16.mxu0 %v684
      %1644 = vmatpush1.bf16.msra.mxu0 %v683
      %1645 = vmatprep.subr.bf16.mxu0 %v686
      %1646 = vmatpush1.bf16.msra.mxu0 %v685
      %1647 = vmatprep.subr.bf16.mxu0 %v688
      %1648 = vmatpush1.bf16.msra.mxu0 %v687
      %1649 = vmatprep.subr.bf16.mxu0 %v690
      %1650 = vmatpush1.bf16.msra.mxu0 %v689
      %1651 = vmatprep.subr.bf16.mxu0 %v692
      %1652 = vmatpush1.bf16.msra.mxu0 %v691
      %1653 = vmatprep.mubr.bf16.mxu0 %v1366
      %1654 = vmatmul.mubr.bf16.gmra.mrb[0].mxu0 %v1365
      %v1655 = vpop.f32.mrb[0].mxu0
      %v1656 = vadd.f32 %v824, %v1655
      %v1657 = vpop.f32.mrb[0].mxu0
      %v1658 = vadd.f32 %v824, %v1657
      %v1659 = vpop.f32.mrb[0].mxu0
      %v1660 = vadd.f32 %v829, %v1659
      %v1661 = vpop.f32.mrb[0].mxu0
      %v1662 = vadd.f32 %v829, %v1661
      %1663 = vmatprep.mubr.bf16.mxu0 %v1374
      %1664 = vmatmul.mubr.bf16.gmra.mrb[0].mxu0 %v1373
      %v1665 = vpop.f32.mrb[0].mxu0
      %v1666 = vadd.f32 %v834, %v1665
      %v1667 = vpop.f32.mrb[0].mxu0
      %v1668 = vadd.f32 %v834, %v1667
      %v1669 = vpop.f32.mrb[0].mxu0
      %v1670 = vadd.f32 %v839, %v1669
      %v1671 = vpop.f32.mrb[0].mxu0
      %v1672 = vadd.f32 %v839, %v1671
      %1673 = vmatprep.mubr.bf16.mxu0 %v1382
      %1674 = vmatmul.mubr.bf16.gmra.mrb[0].mxu0 %v1381
      %v1675 = vpop.f32.mrb[0].mxu0
      %v1676 = vadd.f32 %v844, %v1675
      %v1677 = vpop.f32.mrb[0].mxu0
      %v1678 = vadd.f32 %v844, %v1677
      %v1679 = vpop.f32.mrb[0].mxu0
      %v1680 = vadd.f32 %v849, %v1679
      %v1681 = vpop.f32.mrb[0].mxu0
      %v1682 = vadd.f32 %v849, %v1681
      %1683 = vmatprep.mubr.bf16.mxu0 %v1390
      %1684 = vmatmul.mubr.bf16.gmra.mrb[0].mxu0 %v1389
      %v1685 = vpop.f32.mrb[0].mxu0
      %v1686 = vadd.f32 %v854, %v1685
      %v1687 = vpop.f32.mrb[0].mxu0
      %v1688 = vadd.f32 %v854, %v1687
      %v1689 = vpop.f32.mrb[0].mxu0
      %v1690 = vadd.f32 %v859, %v1689
      %v1691 = vpop.f32.mrb[0].mxu0
      %v1692 = vadd.f32 %v859, %v1691
      %1693 = vmatprep.mubr.bf16.mxu0 %v1398
      %1694 = vmatmul.mubr.bf16.gmra.mrb[0].mxu0 %v1397
      %v1695 = vpop.f32.mrb[0].mxu0
      %v1696 = vadd.f32 %v864, %v1695
      %v1697 = vpop.f32.mrb[0].mxu0
      %v1698 = vadd.f32 %v864, %v1697
      %v1699 = vpop.f32.mrb[0].mxu0
      %v1700 = vadd.f32 %v869, %v1699
      %v1701 = vpop.f32.mrb[0].mxu0
      %v1702 = vadd.f32 %v869, %v1701
      %1703 = vmatprep.mubr.bf16.mxu0 %v1406
      %1704 = vmatmul.mubr.bf16.gmra.mrb[0].mxu0 %v1405
      %v1705 = vpop.f32.mrb[0].mxu0
      %v1706 = vadd.f32 %v874, %v1705
      %v1707 = vpop.f32.mrb[0].mxu0
      %v1708 = vadd.f32 %v874, %v1707
      %v1709 = vpop.f32.mrb[0].mxu0
      %v1710 = vadd.f32 %v879, %v1709
      %v1711 = vpop.f32.mrb[0].mxu0
      %v1712 = vadd.f32 %v879, %v1711
      %1713 = vmatprep.mubr.bf16.mxu0 %v1414
      %1714 = vmatmul.mubr.bf16.gmra.mrb[0].mxu0 %v1413
      %v1715 = vpop.f32.mrb[0].mxu0
      %v1716 = vadd.f32 %v884, %v1715
      %v1717 = vpop.f32.mrb[0].mxu0
      %v1718 = vadd.f32 %v884, %v1717
      %v1719 = vpop.f32.mrb[0].mxu0
      %v1720 = vadd.f32 %v889, %v1719
      %v1721 = vpop.f32.mrb[0].mxu0
      %v1722 = vadd.f32 %v889, %v1721
      %1723 = vmatprep.mubr.bf16.mxu0 %v1422
      %1724 = vmatmul.mubr.bf16.gmra.mrb[0].mxu0 %v1421
      %v1725 = vpop.f32.mrb[0].mxu0
      %v1726 = vadd.f32 %v894, %v1725
      %v1727 = vpop.f32.mrb[0].mxu0
      %v1728 = vadd.f32 %v894, %v1727
      %v1729 = vpop.f32.mrb[0].mxu0
      %v1730 = vadd.f32 %v899, %v1729
      %v1731 = vpop.f32.mrb[0].mxu0
      %v1732 = vadd.f32 %v899, %v1731
      %1733 = vmatprep.mubr.bf16.mxu0 %v1430
      %1734 = vmatmul.mubr.bf16.gmra.mrb[0].mxu0 %v1429
      %v1735 = vpop.f32.mrb[0].mxu0
      %v1736 = vadd.f32 %v904, %v1735
      %v1737 = vpop.f32.mrb[0].mxu0
      %v1738 = vadd.f32 %v904, %v1737
      %v1739 = vpop.f32.mrb[0].mxu0
      %v1740 = vadd.f32 %v909, %v1739
      %v1741 = vpop.f32.mrb[0].mxu0
      %v1742 = vadd.f32 %v909, %v1741
      %1743 = vmatprep.mubr.bf16.mxu0 %v1438
      %1744 = vmatmul.mubr.bf16.gmra.mrb[0].mxu0 %v1437
      %v1745 = vpop.f32.mrb[0].mxu0
      %v1746 = vadd.f32 %v914, %v1745
      %v1747 = vpop.f32.mrb[0].mxu0
      %v1748 = vadd.f32 %v914, %v1747
      %v1749 = vpop.f32.mrb[0].mxu0
      %v1750 = vadd.f32 %v919, %v1749
      %v1751 = vpop.f32.mrb[0].mxu0
      %v1752 = vadd.f32 %v919, %v1751
      %1753 = vmatprep.mubr.bf16.mxu0 %v1446
      %1754 = vmatmul.mubr.bf16.gmra.mrb[0].mxu0 %v1445
      %v1755 = vpop.f32.mrb[0].mxu0
      %v1756 = vadd.f32 %v924, %v1755
      %v1757 = vpop.f32.mrb[0].mxu0
      %v1758 = vadd.f32 %v924, %v1757
      %v1759 = vpop.f32.mrb[0].mxu0
      %v1760 = vadd.f32 %v929, %v1759
      %v1761 = vpop.f32.mrb[0].mxu0
      %v1762 = vadd.f32 %v929, %v1761
      %1763 = vmatprep.mubr.bf16.mxu0 %v1454
      %1764 = vmatmul.mubr.bf16.gmra.mrb[0].mxu0 %v1453
      %v1765 = vpop.f32.mrb[0].mxu0
      %v1766 = vadd.f32 %v934, %v1765
      %v1767 = vpop.f32.mrb[0].mxu0
      %v1768 = vadd.f32 %v934, %v1767
      %v1769 = vpop.f32.mrb[0].mxu0
      %v1770 = vadd.f32 %v939, %v1769
      %v1771 = vpop.f32.mrb[0].mxu0
      %v1772 = vadd.f32 %v939, %v1771
      %1773 = vmatprep.mubr.bf16.mxu0 %v1462
      %1774 = vmatmul.mubr.bf16.gmra.mrb[0].mxu0 %v1461
      %v1775 = vpop.f32.mrb[0].mxu0
      %v1776 = vadd.f32 %v944, %v1775
      %v1777 = vpop.f32.mrb[0].mxu0
      %v1778 = vadd.f32 %v944, %v1777
      %v1779 = vpop.f32.mrb[0].mxu0
      %v1780 = vadd.f32 %v949, %v1779
      %v1781 = vpop.f32.mrb[0].mxu0
      %v1782 = vadd.f32 %v949, %v1781
      %1783 = vmatprep.mubr.bf16.mxu0 %v1470
      %1784 = vmatmul.mubr.bf16.gmra.mrb[0].mxu0 %v1469
      %v1785 = vpop.f32.mrb[0].mxu0
      %v1786 = vadd.f32 %v954, %v1785
      %v1787 = vpop.f32.mrb[0].mxu0
      %v1788 = vadd.f32 %v954, %v1787
      %v1789 = vpop.f32.mrb[0].mxu0
      %v1790 = vadd.f32 %v959, %v1789
      %v1791 = vpop.f32.mrb[0].mxu0
      %v1792 = vadd.f32 %v959, %v1791
      %1793 = vmatprep.mubr.bf16.mxu0 %v1478
      %1794 = vmatmul.mubr.bf16.gmra.mrb[0].mxu0 %v1477
      %v1795 = vpop.f32.mrb[0].mxu0
      %v1796 = vadd.f32 %v964, %v1795
      %v1797 = vpop.f32.mrb[0].mxu0
      %v1798 = vadd.f32 %v964, %v1797
      %v1799 = vpop.f32.mrb[0].mxu0
      %v1800 = vadd.f32 %v969, %v1799
      %v1801 = vpop.f32.mrb[0].mxu0
      %v1802 = vadd.f32 %v969, %v1801
      %1803 = vmatprep.mubr.bf16.mxu0 %v1486
      %1804 = vmatmul.mubr.bf16.gmra.mrb[0].mxu0 %v1485
      %v1805 = vpop.f32.mrb[0].mxu0
      %v1806 = vadd.f32 %v974, %v1805
      %v1807 = vpop.f32.mrb[0].mxu0
      %v1808 = vadd.f32 %v974, %v1807
      %v1809 = vpop.f32.mrb[0].mxu0
      %v1810 = vadd.f32 %v979, %v1809
      %v1811 = vpop.f32.mrb[0].mxu0
      %v1812 = vadd.f32 %v979, %v1811
      %1813 = vdwg.mxu0
      %1814 = vmatprep.subr.bf16.mxu0 %v694
      %1815 = vmatpush1.bf16.msra.mxu0 %v693
      %1816 = vmatprep.subr.bf16.mxu0 %v696
      %1817 = vmatpush1.bf16.msra.mxu0 %v695
      %1818 = vmatprep.subr.bf16.mxu0 %v698
      %1819 = vmatpush1.bf16.msra.mxu0 %v697
      %1820 = vmatprep.subr.bf16.mxu0 %v700
      %1821 = vmatpush1.bf16.msra.mxu0 %v699
      %1822 = vmatprep.subr.bf16.mxu0 %v702
      %1823 = vmatpush1.bf16.msra.mxu0 %v701
      %1824 = vmatprep.subr.bf16.mxu0 %v704
      %1825 = vmatpush1.bf16.msra.mxu0 %v703
      %1826 = vmatprep.subr.bf16.mxu0 %v706
      %1827 = vmatpush1.bf16.msra.mxu0 %v705
      %1828 = vmatprep.subr.bf16.mxu0 %v708
      %1829 = vmatpush1.bf16.msra.mxu0 %v707
      %1830 = vmatprep.subr.bf16.mxu0 %v710
      %1831 = vmatpush1.bf16.msra.mxu0 %v709
      %1832 = vmatprep.subr.bf16.mxu0 %v712
      %1833 = vmatpush1.bf16.msra.mxu0 %v711
      %1834 = vmatprep.subr.bf16.mxu0 %v714
      %1835 = vmatpush1.bf16.msra.mxu0 %v713
      %1836 = vmatprep.subr.bf16.mxu0 %v716
      %1837 = vmatpush1.bf16.msra.mxu0 %v715
      %1838 = vmatprep.subr.bf16.mxu0 %v718
      %1839 = vmatpush1.bf16.msra.mxu0 %v717
      %1840 = vmatprep.subr.bf16.mxu0 %v720
      %1841 = vmatpush1.bf16.msra.mxu0 %v719
      %1842 = vmatprep.subr.bf16.mxu0 %v722
      %1843 = vmatpush1.bf16.msra.mxu0 %v721
      %1844 = vmatprep.subr.bf16.mxu0 %v724
      %1845 = vmatpush1.bf16.msra.mxu0 %v723
      %1846 = vmatprep.mubr.bf16.mxu0 %v1368
      %1847 = vmatmul.mubr.bf16.gmra.mrb[0].mxu0 %v1367
      %v1848 = vpop.f32.mrb[0].mxu0
      %v1849 = vadd.f32 %v1656, %v1848
      %v1850 = vpop.f32.mrb[0].mxu0
      %v1851 = vadd.f32 %v1658, %v1850
      %v1852 = vpop.f32.mrb[0].mxu0
      %v1853 = vadd.f32 %v1660, %v1852
      %v1854 = vpop.f32.mrb[0].mxu0
      %v1855 = vadd.f32 %v1662, %v1854
      %1856 = vmatprep.mubr.bf16.mxu0 %v1376
      %1857 = vmatmul.mubr.bf16.gmra.mrb[0].mxu0 %v1375
      %v1858 = vpop.f32.mrb[0].mxu0
      %v1859 = vadd.f32 %v1666, %v1858
      %v1860 = vpop.f32.mrb[0].mxu0
      %v1861 = vadd.f32 %v1668, %v1860
      %v1862 = vpop.f32.mrb[0].mxu0
      %v1863 = vadd.f32 %v1670, %v1862
      %v1864 = vpop.f32.mrb[0].mxu0
      %v1865 = vadd.f32 %v1672, %v1864
      %1866 = vmatprep.mubr.bf16.mxu0 %v1384
      %1867 = vmatmul.mubr.bf16.gmra.mrb[0].mxu0 %v1383
      %v1868 = vpop.f32.mrb[0].mxu0
      %v1869 = vadd.f32 %v1676, %v1868
      %v1870 = vpop.f32.mrb[0].mxu0
      %v1871 = vadd.f32 %v1678, %v1870
      %v1872 = vpop.f32.mrb[0].mxu0
      %v1873 = vadd.f32 %v1680, %v1872
      %v1874 = vpop.f32.mrb[0].mxu0
      %v1875 = vadd.f32 %v1682, %v1874
      %1876 = vmatprep.mubr.bf16.mxu0 %v1392
      %1877 = vmatmul.mubr.bf16.gmra.mrb[0].mxu0 %v1391
      %v1878 = vpop.f32.mrb[0].mxu0
      %v1879 = vadd.f32 %v1686, %v1878
      %v1880 = vpop.f32.mrb[0].mxu0
      %v1881 = vadd.f32 %v1688, %v1880
      %v1882 = vpop.f32.mrb[0].mxu0
      %v1883 = vadd.f32 %v1690, %v1882
      %v1884 = vpop.f32.mrb[0].mxu0
      %v1885 = vadd.f32 %v1692, %v1884
      %1886 = vmatprep.mubr.bf16.mxu0 %v1400
      %1887 = vmatmul.mubr.bf16.gmra.mrb[0].mxu0 %v1399
      %v1888 = vpop.f32.mrb[0].mxu0
      %v1889 = vadd.f32 %v1696, %v1888
      %v1890 = vpop.f32.mrb[0].mxu0
      %v1891 = vadd.f32 %v1698, %v1890
      %v1892 = vpop.f32.mrb[0].mxu0
      %v1893 = vadd.f32 %v1700, %v1892
      %v1894 = vpop.f32.mrb[0].mxu0
      %v1895 = vadd.f32 %v1702, %v1894
      %1896 = vmatprep.mubr.bf16.mxu0 %v1408
      %1897 = vmatmul.mubr.bf16.gmra.mrb[0].mxu0 %v1407
      %v1898 = vpop.f32.mrb[0].mxu0
      %v1899 = vadd.f32 %v1706, %v1898
      %v1900 = vpop.f32.mrb[0].mxu0
      %v1901 = vadd.f32 %v1708, %v1900
      %v1902 = vpop.f32.mrb[0].mxu0
      %v1903 = vadd.f32 %v1710, %v1902
      %v1904 = vpop.f32.mrb[0].mxu0
      %v1905 = vadd.f32 %v1712, %v1904
      %1906 = vmatprep.mubr.bf16.mxu0 %v1416
      %1907 = vmatmul.mubr.bf16.gmra.mrb[0].mxu0 %v1415
      %v1908 = vpop.f32.mrb[0].mxu0
      %v1909 = vadd.f32 %v1716, %v1908
      %v1910 = vpop.f32.mrb[0].mxu0
      %v1911 = vadd.f32 %v1718, %v1910
      %v1912 = vpop.f32.mrb[0].mxu0
      %v1913 = vadd.f32 %v1720, %v1912
      %v1914 = vpop.f32.mrb[0].mxu0
      %v1915 = vadd.f32 %v1722, %v1914
      %1916 = vmatprep.mubr.bf16.mxu0 %v1424
      %1917 = vmatmul.mubr.bf16.gmra.mrb[0].mxu0 %v1423
      %v1918 = vpop.f32.mrb[0].mxu0
      %v1919 = vadd.f32 %v1726, %v1918
      %v1920 = vpop.f32.mrb[0].mxu0
      %v1921 = vadd.f32 %v1728, %v1920
      %v1922 = vpop.f32.mrb[0].mxu0
      %v1923 = vadd.f32 %v1730, %v1922
      %v1924 = vpop.f32.mrb[0].mxu0
      %v1925 = vadd.f32 %v1732, %v1924
      %1926 = vmatprep.mubr.bf16.mxu0 %v1432
      %1927 = vmatmul.mubr.bf16.gmra.mrb[0].mxu0 %v1431
      %v1928 = vpop.f32.mrb[0].mxu0
      %v1929 = vadd.f32 %v1736, %v1928
      %v1930 = vpop.f32.mrb[0].mxu0
      %v1931 = vadd.f32 %v1738, %v1930
      %v1932 = vpop.f32.mrb[0].mxu0
      %v1933 = vadd.f32 %v1740, %v1932
      %v1934 = vpop.f32.mrb[0].mxu0
      %v1935 = vadd.f32 %v1742, %v1934
      %1936 = vmatprep.mubr.bf16.mxu0 %v1440
      %1937 = vmatmul.mubr.bf16.gmra.mrb[0].mxu0 %v1439
      %v1938 = vpop.f32.mrb[0].mxu0
      %v1939 = vadd.f32 %v1746, %v1938
      %v1940 = vpop.f32.mrb[0].mxu0
      %v1941 = vadd.f32 %v1748, %v1940
      %v1942 = vpop.f32.mrb[0].mxu0
      %v1943 = vadd.f32 %v1750, %v1942
      %v1944 = vpop.f32.mrb[0].mxu0
      %v1945 = vadd.f32 %v1752, %v1944
      %1946 = vmatprep.mubr.bf16.mxu0 %v1448
      %1947 = vmatmul.mubr.bf16.gmra.mrb[0].mxu0 %v1447
      %v1948 = vpop.f32.mrb[0].mxu0
      %v1949 = vadd.f32 %v1756, %v1948
      %v1950 = vpop.f32.mrb[0].mxu0
      %v1951 = vadd.f32 %v1758, %v1950
      %v1952 = vpop.f32.mrb[0].mxu0
      %v1953 = vadd.f32 %v1760, %v1952
      %v1954 = vpop.f32.mrb[0].mxu0
      %v1955 = vadd.f32 %v1762, %v1954
      %1956 = vmatprep.mubr.bf16.mxu0 %v1456
      %1957 = vmatmul.mubr.bf16.gmra.mrb[0].mxu0 %v1455
      %v1958 = vpop.f32.mrb[0].mxu0
      %v1959 = vadd.f32 %v1766, %v1958
      %v1960 = vpop.f32.mrb[0].mxu0
      %v1961 = vadd.f32 %v1768, %v1960
      %v1962 = vpop.f32.mrb[0].mxu0
      %v1963 = vadd.f32 %v1770, %v1962
      %v1964 = vpop.f32.mrb[0].mxu0
      %v1965 = vadd.f32 %v1772, %v1964
      %1966 = vmatprep.mubr.bf16.mxu0 %v1464
      %1967 = vmatmul.mubr.bf16.gmra.mrb[0].mxu0 %v1463
      %v1968 = vpop.f32.mrb[0].mxu0
      %v1969 = vadd.f32 %v1776, %v1968
      %v1970 = vpop.f32.mrb[0].mxu0
      %v1971 = vadd.f32 %v1778, %v1970
      %v1972 = vpop.f32.mrb[0].mxu0
      %v1973 = vadd.f32 %v1780, %v1972
      %v1974 = vpop.f32.mrb[0].mxu0
      %v1975 = vadd.f32 %v1782, %v1974
      %1976 = vmatprep.mubr.bf16.mxu0 %v1472
      %1977 = vmatmul.mubr.bf16.gmra.mrb[0].mxu0 %v1471
      %v1978 = vpop.f32.mrb[0].mxu0
      %v1979 = vadd.f32 %v1786, %v1978
      %v1980 = vpop.f32.mrb[0].mxu0
      %v1981 = vadd.f32 %v1788, %v1980
      %v1982 = vpop.f32.mrb[0].mxu0
      %v1983 = vadd.f32 %v1790, %v1982
      %v1984 = vpop.f32.mrb[0].mxu0
      %v1985 = vadd.f32 %v1792, %v1984
      %1986 = vmatprep.mubr.bf16.mxu0 %v1480
      %1987 = vmatmul.mubr.bf16.gmra.mrb[0].mxu0 %v1479
      %v1988 = vpop.f32.mrb[0].mxu0
      %v1989 = vadd.f32 %v1796, %v1988
      %v1990 = vpop.f32.mrb[0].mxu0
      %v1991 = vadd.f32 %v1798, %v1990
      %v1992 = vpop.f32.mrb[0].mxu0
      %v1993 = vadd.f32 %v1800, %v1992
      %v1994 = vpop.f32.mrb[0].mxu0
      %v1995 = vadd.f32 %v1802, %v1994
      %1996 = vmatprep.mubr.bf16.mxu0 %v1488
      %1997 = vmatmul.mubr.bf16.gmra.mrb[0].mxu0 %v1487
      %v1998 = vpop.f32.mrb[0].mxu0
      %v1999 = vadd.f32 %v1806, %v1998
      %v2000 = vpop.f32.mrb[0].mxu0
      %v2001 = vadd.f32 %v1808, %v2000
      %v2002 = vpop.f32.mrb[0].mxu0
      %v2003 = vadd.f32 %v1810, %v2002
      %v2004 = vpop.f32.mrb[0].mxu0
      %v2005 = vadd.f32 %v1812, %v2004
      %2006 = vdwg.mxu0
      %2007 = vmatprep.subr.bf16.mxu0 %v726
      %2008 = vmatpush1.bf16.msra.mxu0 %v725
      %2009 = vmatprep.subr.bf16.mxu0 %v728
      %2010 = vmatpush1.bf16.msra.mxu0 %v727
      %2011 = vmatprep.subr.bf16.mxu0 %v730
      %2012 = vmatpush1.bf16.msra.mxu0 %v729
      %2013 = vmatprep.subr.bf16.mxu0 %v732
      %2014 = vmatpush1.bf16.msra.mxu0 %v731
      %2015 = vmatprep.subr.bf16.mxu0 %v734
      %2016 = vmatpush1.bf16.msra.mxu0 %v733
      %2017 = vmatprep.subr.bf16.mxu0 %v736
      %2018 = vmatpush1.bf16.msra.mxu0 %v735
      %2019 = vmatprep.subr.bf16.mxu0 %v738
      %2020 = vmatpush1.bf16.msra.mxu0 %v737
      %2021 = vmatprep.subr.bf16.mxu0 %v740
      %2022 = vmatpush1.bf16.msra.mxu0 %v739
      %2023 = vmatprep.subr.bf16.mxu0 %v742
      %2024 = vmatpush1.bf16.msra.mxu0 %v741
      %2025 = vmatprep.subr.bf16.mxu0 %v744
      %2026 = vmatpush1.bf16.msra.mxu0 %v743
      %2027 = vmatprep.subr.bf16.mxu0 %v746
      %2028 = vmatpush1.bf16.msra.mxu0 %v745
      %2029 = vmatprep.subr.bf16.mxu0 %v748
      %2030 = vmatpush1.bf16.msra.mxu0 %v747
      %2031 = vmatprep.subr.bf16.mxu0 %v750
      %2032 = vmatpush1.bf16.msra.mxu0 %v749
      %2033 = vmatprep.subr.bf16.mxu0 %v752
      %2034 = vmatpush1.bf16.msra.mxu0 %v751
      %2035 = vmatprep.subr.bf16.mxu0 %v754
      %2036 = vmatpush1.bf16.msra.mxu0 %v753
      %2037 = vmatprep.subr.bf16.mxu0 %v756
      %2038 = vmatpush1.bf16.msra.mxu0 %v755
      %2039 = vmatprep.mubr.bf16.mxu0 %v1370
      %2040 = vmatmul.mubr.bf16.gmra.mrb[0].mxu0 %v1369
      %v2041 = vpop.f32.mrb[0].mxu0
      %v2042 = vadd.f32 %v1849, %v2041
      %v2043 = vpop.f32.mrb[0].mxu0
      %v2044 = vadd.f32 %v1851, %v2043
      %v2045 = vpop.f32.mrb[0].mxu0
      %v2046 = vadd.f32 %v1853, %v2045
      %v2047 = vpop.f32.mrb[0].mxu0
      %v2048 = vadd.f32 %v1855, %v2047
      %2049 = vmatprep.mubr.bf16.mxu0 %v1378
      %2050 = vmatmul.mubr.bf16.gmra.mrb[0].mxu0 %v1377
      %v2051 = vpop.f32.mrb[0].mxu0
      %v2052 = vadd.f32 %v1859, %v2051
      %v2053 = vpop.f32.mrb[0].mxu0
      %v2054 = vadd.f32 %v1861, %v2053
      %v2055 = vpop.f32.mrb[0].mxu0
      %v2056 = vadd.f32 %v1863, %v2055
      %v2057 = vpop.f32.mrb[0].mxu0
      %v2058 = vadd.f32 %v1865, %v2057
      %2059 = vmatprep.mubr.bf16.mxu0 %v1386
      %2060 = vmatmul.mubr.bf16.gmra.mrb[0].mxu0 %v1385
      %v2061 = vpop.f32.mrb[0].mxu0
      %v2062 = vadd.f32 %v1869, %v2061
      %v2063 = vpop.f32.mrb[0].mxu0
      %v2064 = vadd.f32 %v1871, %v2063
      %v2065 = vpop.f32.mrb[0].mxu0
      %v2066 = vadd.f32 %v1873, %v2065
      %v2067 = vpop.f32.mrb[0].mxu0
      %v2068 = vadd.f32 %v1875, %v2067
      %2069 = vmatprep.mubr.bf16.mxu0 %v1394
      %2070 = vmatmul.mubr.bf16.gmra.mrb[0].mxu0 %v1393
      %v2071 = vpop.f32.mrb[0].mxu0
      %v2072 = vadd.f32 %v1879, %v2071
      %v2073 = vpop.f32.mrb[0].mxu0
      %v2074 = vadd.f32 %v1881, %v2073
      %v2075 = vpop.f32.mrb[0].mxu0
      %v2076 = vadd.f32 %v1883, %v2075
      %v2077 = vpop.f32.mrb[0].mxu0
      %v2078 = vadd.f32 %v1885, %v2077
      %2079 = vmatprep.mubr.bf16.mxu0 %v1402
      %2080 = vmatmul.mubr.bf16.gmra.mrb[0].mxu0 %v1401
      %v2081 = vpop.f32.mrb[0].mxu0
      %v2082 = vadd.f32 %v1889, %v2081
      %v2083 = vpop.f32.mrb[0].mxu0
      %v2084 = vadd.f32 %v1891, %v2083
      %v2085 = vpop.f32.mrb[0].mxu0
      %v2086 = vadd.f32 %v1893, %v2085
      %v2087 = vpop.f32.mrb[0].mxu0
      %v2088 = vadd.f32 %v1895, %v2087
      %2089 = vmatprep.mubr.bf16.mxu0 %v1410
      %2090 = vmatmul.mubr.bf16.gmra.mrb[0].mxu0 %v1409
      %v2091 = vpop.f32.mrb[0].mxu0
      %v2092 = vadd.f32 %v1899, %v2091
      %v2093 = vpop.f32.mrb[0].mxu0
      %v2094 = vadd.f32 %v1901, %v2093
      %v2095 = vpop.f32.mrb[0].mxu0
      %v2096 = vadd.f32 %v1903, %v2095
      %v2097 = vpop.f32.mrb[0].mxu0
      %v2098 = vadd.f32 %v1905, %v2097
      %2099 = vmatprep.mubr.bf16.mxu0 %v1418
      %2100 = vmatmul.mubr.bf16.gmra.mrb[0].mxu0 %v1417
      %v2101 = vpop.f32.mrb[0].mxu0
      %v2102 = vadd.f32 %v1909, %v2101
      %v2103 = vpop.f32.mrb[0].mxu0
      %v2104 = vadd.f32 %v1911, %v2103
      %v2105 = vpop.f32.mrb[0].mxu0
      %v2106 = vadd.f32 %v1913, %v2105
      %v2107 = vpop.f32.mrb[0].mxu0
      %v2108 = vadd.f32 %v1915, %v2107
      %2109 = vmatprep.mubr.bf16.mxu0 %v1426
      %2110 = vmatmul.mubr.bf16.gmra.mrb[0].mxu0 %v1425
      %v2111 = vpop.f32.mrb[0].mxu0
      %v2112 = vadd.f32 %v1919, %v2111
      %v2113 = vpop.f32.mrb[0].mxu0
      %v2114 = vadd.f32 %v1921, %v2113
      %v2115 = vpop.f32.mrb[0].mxu0
      %v2116 = vadd.f32 %v1923, %v2115
      %v2117 = vpop.f32.mrb[0].mxu0
      %v2118 = vadd.f32 %v1925, %v2117
      %2119 = vmatprep.mubr.bf16.mxu0 %v1434
      %2120 = vmatmul.mubr.bf16.gmra.mrb[0].mxu0 %v1433
      %v2121 = vpop.f32.mrb[0].mxu0
      %v2122 = vadd.f32 %v1929, %v2121
      %v2123 = vpop.f32.mrb[0].mxu0
      %v2124 = vadd.f32 %v1931, %v2123
      %v2125 = vpop.f32.mrb[0].mxu0
      %v2126 = vadd.f32 %v1933, %v2125
      %v2127 = vpop.f32.mrb[0].mxu0
      %v2128 = vadd.f32 %v1935, %v2127
      %2129 = vmatprep.mubr.bf16.mxu0 %v1442
      %2130 = vmatmul.mubr.bf16.gmra.mrb[0].mxu0 %v1441
      %v2131 = vpop.f32.mrb[0].mxu0
      %v2132 = vadd.f32 %v1939, %v2131
      %v2133 = vpop.f32.mrb[0].mxu0
      %v2134 = vadd.f32 %v1941, %v2133
      %v2135 = vpop.f32.mrb[0].mxu0
      %v2136 = vadd.f32 %v1943, %v2135
      %v2137 = vpop.f32.mrb[0].mxu0
      %v2138 = vadd.f32 %v1945, %v2137
      %2139 = vmatprep.mubr.bf16.mxu0 %v1450
      %2140 = vmatmul.mubr.bf16.gmra.mrb[0].mxu0 %v1449
      %v2141 = vpop.f32.mrb[0].mxu0
      %v2142 = vadd.f32 %v1949, %v2141
      %v2143 = vpop.f32.mrb[0].mxu0
      %v2144 = vadd.f32 %v1951, %v2143
      %v2145 = vpop.f32.mrb[0].mxu0
      %v2146 = vadd.f32 %v1953, %v2145
      %v2147 = vpop.f32.mrb[0].mxu0
      %v2148 = vadd.f32 %v1955, %v2147
      %2149 = vmatprep.mubr.bf16.mxu0 %v1458
      %2150 = vmatmul.mubr.bf16.gmra.mrb[0].mxu0 %v1457
      %v2151 = vpop.f32.mrb[0].mxu0
      %v2152 = vadd.f32 %v1959, %v2151
      %v2153 = vpop.f32.mrb[0].mxu0
      %v2154 = vadd.f32 %v1961, %v2153
      %v2155 = vpop.f32.mrb[0].mxu0
      %v2156 = vadd.f32 %v1963, %v2155
      %v2157 = vpop.f32.mrb[0].mxu0
      %v2158 = vadd.f32 %v1965, %v2157
      %2159 = vmatprep.mubr.bf16.mxu0 %v1466
      %2160 = vmatmul.mubr.bf16.gmra.mrb[0].mxu0 %v1465
      %v2161 = vpop.f32.mrb[0].mxu0
      %v2162 = vadd.f32 %v1969, %v2161
      %v2163 = vpop.f32.mrb[0].mxu0
      %v2164 = vadd.f32 %v1971, %v2163
      %v2165 = vpop.f32.mrb[0].mxu0
      %v2166 = vadd.f32 %v1973, %v2165
      %v2167 = vpop.f32.mrb[0].mxu0
      %v2168 = vadd.f32 %v1975, %v2167
      %2169 = vmatprep.mubr.bf16.mxu0 %v1474
      %2170 = vmatmul.mubr.bf16.gmra.mrb[0].mxu0 %v1473
      %v2171 = vpop.f32.mrb[0].mxu0
      %v2172 = vadd.f32 %v1979, %v2171
      %v2173 = vpop.f32.mrb[0].mxu0
      %v2174 = vadd.f32 %v1981, %v2173
      %v2175 = vpop.f32.mrb[0].mxu0
      %v2176 = vadd.f32 %v1983, %v2175
      %v2177 = vpop.f32.mrb[0].mxu0
      %v2178 = vadd.f32 %v1985, %v2177
      %2179 = vmatprep.mubr.bf16.mxu0 %v1482
      %2180 = vmatmul.mubr.bf16.gmra.mrb[0].mxu0 %v1481
      %v2181 = vpop.f32.mrb[0].mxu0
      %v2182 = vadd.f32 %v1989, %v2181
      %v2183 = vpop.f32.mrb[0].mxu0
      %v2184 = vadd.f32 %v1991, %v2183
      %v2185 = vpop.f32.mrb[0].mxu0
      %v2186 = vadd.f32 %v1993, %v2185
      %v2187 = vpop.f32.mrb[0].mxu0
      %v2188 = vadd.f32 %v1995, %v2187
      %2189 = vmatprep.mubr.bf16.mxu0 %v1490
      %2190 = vmatmul.mubr.bf16.gmra.mrb[0].mxu0 %v1489
      %v2191 = vpop.f32.mrb[0].mxu0
      %v2192 = vadd.f32 %v1999, %v2191
      %v2193 = vpop.f32.mrb[0].mxu0
      %v2194 = vadd.f32 %v2001, %v2193
      %v2195 = vpop.f32.mrb[0].mxu0
      %v2196 = vadd.f32 %v2003, %v2195
      %v2197 = vpop.f32.mrb[0].mxu0
      %v2198 = vadd.f32 %v2005, %v2197
      %2199 = vdwg.mxu0
      %2200 = vmatprep.subr.bf16.mxu0 %v758
      %2201 = vmatpush1.bf16.msra.mxu0 %v757
      %2202 = vmatprep.subr.bf16.mxu0 %v760
      %2203 = vmatpush1.bf16.msra.mxu0 %v759
      %2204 = vmatprep.subr.bf16.mxu0 %v762
      %2205 = vmatpush1.bf16.msra.mxu0 %v761
      %2206 = vmatprep.subr.bf16.mxu0 %v764
      %2207 = vmatpush1.bf16.msra.mxu0 %v763
      %2208 = vmatprep.subr.bf16.mxu0 %v766
      %2209 = vmatpush1.bf16.msra.mxu0 %v765
      %2210 = vmatprep.subr.bf16.mxu0 %v768
      %2211 = vmatpush1.bf16.msra.mxu0 %v767
      %2212 = vmatprep.subr.bf16.mxu0 %v770
      %2213 = vmatpush1.bf16.msra.mxu0 %v769
      %2214 = vmatprep.subr.bf16.mxu0 %v772
      %2215 = vmatpush1.bf16.msra.mxu0 %v771
      %2216 = vmatprep.subr.bf16.mxu0 %v774
      %2217 = vmatpush1.bf16.msra.mxu0 %v773
      %2218 = vmatprep.subr.bf16.mxu0 %v776
      %2219 = vmatpush1.bf16.msra.mxu0 %v775
      %2220 = vmatprep.subr.bf16.mxu0 %v778
      %2221 = vmatpush1.bf16.msra.mxu0 %v777
      %2222 = vmatprep.subr.bf16.mxu0 %v780
      %2223 = vmatpush1.bf16.msra.mxu0 %v779
      %2224 = vmatprep.subr.bf16.mxu0 %v782
      %2225 = vmatpush1.bf16.msra.mxu0 %v781
      %2226 = vmatprep.subr.bf16.mxu0 %v784
      %2227 = vmatpush1.bf16.msra.mxu0 %v783
      %2228 = vmatprep.subr.bf16.mxu0 %v786
      %2229 = vmatpush1.bf16.msra.mxu0 %v785
      %2230 = vmatprep.subr.bf16.mxu0 %v788
      %2231 = vmatpush1.bf16.msra.mxu0 %v787
      %2232 = vmatprep.mubr.bf16.mxu0 %v1372
      %2233 = vmatmul.mubr.bf16.gmra.mrb[0].mxu0 %v1371
      %v2234 = vpop.f32.mrb[0].mxu0
      %v2235 = vadd.f32 %v2042, %v2234
      %v2236 = vpop.f32.mrb[0].mxu0
      %v2237 = vadd.f32 %v2044, %v2236
      %v2238 = vpop.f32.mrb[0].mxu0
      %v2239 = vadd.f32 %v2046, %v2238
      %v2240 = vpop.f32.mrb[0].mxu0
      %v2241 = vadd.f32 %v2048, %v2240
      %2242 = vmatprep.mubr.bf16.mxu0 %v1380
      %2243 = vmatmul.mubr.bf16.gmra.mrb[0].mxu0 %v1379
      %v2244 = vpop.f32.mrb[0].mxu0
      %v2245 = vadd.f32 %v2052, %v2244
      %v2246 = vpop.f32.mrb[0].mxu0
      %v2247 = vadd.f32 %v2054, %v2246
      %v2248 = vpop.f32.mrb[0].mxu0
      %v2249 = vadd.f32 %v2056, %v2248
      %v2250 = vpop.f32.mrb[0].mxu0
      %v2251 = vadd.f32 %v2058, %v2250
      %2252 = vmatprep.mubr.bf16.mxu0 %v1388
      %2253 = vmatmul.mubr.bf16.gmra.mrb[0].mxu0 %v1387
      %v2254 = vpop.f32.mrb[0].mxu0
      %v2255 = vadd.f32 %v2062, %v2254
      %v2256 = vpop.f32.mrb[0].mxu0
      %v2257 = vadd.f32 %v2064, %v2256
      %v2258 = vpop.f32.mrb[0].mxu0
      %v2259 = vadd.f32 %v2066, %v2258
      %v2260 = vpop.f32.mrb[0].mxu0
      %v2261 = vadd.f32 %v2068, %v2260
      %2262 = vmatprep.mubr.bf16.mxu0 %v1396
      %2263 = vmatmul.mubr.bf16.gmra.mrb[0].mxu0 %v1395
      %v2264 = vpop.f32.mrb[0].mxu0
      %v2265 = vadd.f32 %v2072, %v2264
      %v2266 = vpop.f32.mrb[0].mxu0
      %v2267 = vadd.f32 %v2074, %v2266
      %v2268 = vpop.f32.mrb[0].mxu0
      %v2269 = vadd.f32 %v2076, %v2268
      %v2270 = vpop.f32.mrb[0].mxu0
      %v2271 = vadd.f32 %v2078, %v2270
      %2272 = vmatprep.mubr.bf16.mxu0 %v1404
      %2273 = vmatmul.mubr.bf16.gmra.mrb[0].mxu0 %v1403
      %v2274 = vpop.f32.mrb[0].mxu0
      %v2275 = vadd.f32 %v2082, %v2274
      %v2276 = vpop.f32.mrb[0].mxu0
      %v2277 = vadd.f32 %v2084, %v2276
      %v2278 = vpop.f32.mrb[0].mxu0
      %v2279 = vadd.f32 %v2086, %v2278
      %v2280 = vpop.f32.mrb[0].mxu0
      %v2281 = vadd.f32 %v2088, %v2280
      %2282 = vmatprep.mubr.bf16.mxu0 %v1412
      %2283 = vmatmul.mubr.bf16.gmra.mrb[0].mxu0 %v1411
      %v2284 = vpop.f32.mrb[0].mxu0
      %v2285 = vadd.f32 %v2092, %v2284
      %v2286 = vpop.f32.mrb[0].mxu0
      %v2287 = vadd.f32 %v2094, %v2286
      %v2288 = vpop.f32.mrb[0].mxu0
      %v2289 = vadd.f32 %v2096, %v2288
      %v2290 = vpop.f32.mrb[0].mxu0
      %v2291 = vadd.f32 %v2098, %v2290
      %2292 = vmatprep.mubr.bf16.mxu0 %v1420
      %2293 = vmatmul.mubr.bf16.gmra.mrb[0].mxu0 %v1419
      %v2294 = vpop.f32.mrb[0].mxu0
      %v2295 = vadd.f32 %v2102, %v2294
      %v2296 = vpop.f32.mrb[0].mxu0
      %v2297 = vadd.f32 %v2104, %v2296
      %v2298 = vpop.f32.mrb[0].mxu0
      %v2299 = vadd.f32 %v2106, %v2298
      %v2300 = vpop.f32.mrb[0].mxu0
      %v2301 = vadd.f32 %v2108, %v2300
      %2302 = vmatprep.mubr.bf16.mxu0 %v1428
      %2303 = vmatmul.mubr.bf16.gmra.mrb[0].mxu0 %v1427
      %v2304 = vpop.f32.mrb[0].mxu0
      %v2305 = vadd.f32 %v2112, %v2304
      %v2306 = vpop.f32.mrb[0].mxu0
      %v2307 = vadd.f32 %v2114, %v2306
      %v2308 = vpop.f32.mrb[0].mxu0
      %v2309 = vadd.f32 %v2116, %v2308
      %v2310 = vpop.f32.mrb[0].mxu0
      %v2311 = vadd.f32 %v2118, %v2310
      %2312 = vmatprep.mubr.bf16.mxu0 %v1436
      %2313 = vmatmul.mubr.bf16.gmra.mrb[0].mxu0 %v1435
      %v2314 = vpop.f32.mrb[0].mxu0
      %v2315 = vadd.f32 %v2122, %v2314
      %v2316 = vpop.f32.mrb[0].mxu0
      %v2317 = vadd.f32 %v2124, %v2316
      %v2318 = vpop.f32.mrb[0].mxu0
      %v2319 = vadd.f32 %v2126, %v2318
      %v2320 = vpop.f32.mrb[0].mxu0
      %v2321 = vadd.f32 %v2128, %v2320
      %2322 = vmatprep.mubr.bf16.mxu0 %v1444
      %2323 = vmatmul.mubr.bf16.gmra.mrb[0].mxu0 %v1443
      %v2324 = vpop.f32.mrb[0].mxu0
      %v2325 = vadd.f32 %v2132, %v2324
      %v2326 = vpop.f32.mrb[0].mxu0
      %v2327 = vadd.f32 %v2134, %v2326
      %v2328 = vpop.f32.mrb[0].mxu0
      %v2329 = vadd.f32 %v2136, %v2328
      %v2330 = vpop.f32.mrb[0].mxu0
      %v2331 = vadd.f32 %v2138, %v2330
      %2332 = vmatprep.mubr.bf16.mxu0 %v1452
      %2333 = vmatmul.mubr.bf16.gmra.mrb[0].mxu0 %v1451
      %v2334 = vpop.f32.mrb[0].mxu0
      %v2335 = vadd.f32 %v2142, %v2334
      %v2336 = vpop.f32.mrb[0].mxu0
      %v2337 = vadd.f32 %v2144, %v2336
      %v2338 = vpop.f32.mrb[0].mxu0
      %v2339 = vadd.f32 %v2146, %v2338
      %v2340 = vpop.f32.mrb[0].mxu0
      %v2341 = vadd.f32 %v2148, %v2340
      %2342 = vmatprep.mubr.bf16.mxu0 %v1460
      %2343 = vmatmul.mubr.bf16.gmra.mrb[0].mxu0 %v1459
      %v2344 = vpop.f32.mrb[0].mxu0
      %v2345 = vadd.f32 %v2152, %v2344
      %v2346 = vpop.f32.mrb[0].mxu0
      %v2347 = vadd.f32 %v2154, %v2346
      %v2348 = vpop.f32.mrb[0].mxu0
      %v2349 = vadd.f32 %v2156, %v2348
      %v2350 = vpop.f32.mrb[0].mxu0
      %v2351 = vadd.f32 %v2158, %v2350
      %2352 = vmatprep.mubr.bf16.mxu0 %v1468
      %2353 = vmatmul.mubr.bf16.gmra.mrb[0].mxu0 %v1467
      %v2354 = vpop.f32.mrb[0].mxu0
      %v2355 = vadd.f32 %v2162, %v2354
      %v2356 = vpop.f32.mrb[0].mxu0
      %v2357 = vadd.f32 %v2164, %v2356
      %v2358 = vpop.f32.mrb[0].mxu0
      %v2359 = vadd.f32 %v2166, %v2358
      %v2360 = vpop.f32.mrb[0].mxu0
      %v2361 = vadd.f32 %v2168, %v2360
      %2362 = vmatprep.mubr.bf16.mxu0 %v1476
      %2363 = vmatmul.mubr.bf16.gmra.mrb[0].mxu0 %v1475
      %v2364 = vpop.f32.mrb[0].mxu0
      %v2365 = vadd.f32 %v2172, %v2364
      %v2366 = vpop.f32.mrb[0].mxu0
      %v2367 = vadd.f32 %v2174, %v2366
      %v2368 = vpop.f32.mrb[0].mxu0
      %v2369 = vadd.f32 %v2176, %v2368
      %v2370 = vpop.f32.mrb[0].mxu0
      %v2371 = vadd.f32 %v2178, %v2370
      %2372 = vmatprep.mubr.bf16.mxu0 %v1484
      %2373 = vmatmul.mubr.bf16.gmra.mrb[0].mxu0 %v1483
      %v2374 = vpop.f32.mrb[0].mxu0
      %v2375 = vadd.f32 %v2182, %v2374
      %v2376 = vpop.f32.mrb[0].mxu0
      %v2377 = vadd.f32 %v2184, %v2376
      %v2378 = vpop.f32.mrb[0].mxu0
      %v2379 = vadd.f32 %v2186, %v2378
      %v2380 = vpop.f32.mrb[0].mxu0
      %v2381 = vadd.f32 %v2188, %v2380
      %2382 = vmatprep.mubr.bf16.mxu0 %v1492
      %2383 = vmatmul.mubr.bf16.gmra.mrb[0].mxu0 %v1491
      %v2384 = vpop.f32.mrb[0].mxu0
      %v2385 = vadd.f32 %v2192, %v2384
      %v2386 = vpop.f32.mrb[0].mxu0
      %v2387 = vadd.f32 %v2194, %v2386
      %v2388 = vpop.f32.mrb[0].mxu0
      %v2389 = vadd.f32 %v2196, %v2388
      %v2390 = vpop.f32.mrb[0].mxu0
      %v2391 = vadd.f32 %v2198, %v2390
      %2392 = vdwg.mxu0
      %v2393 = vmul.f32 %v2235, 0.2
      %v2394 = vmul.f32 %v2237, 0.2
      %v2395 = vmul.f32 %v2239, 0.2
      %v2396 = vmul.f32 %v2241, 0.2
      %v2397 = vmul.f32 %v2245, 0.2
      %v2398 = vmul.f32 %v2247, 0.2
      %v2399 = vmul.f32 %v2249, 0.2
      %v2400 = vmul.f32 %v2251, 0.2
      %v2401 = vmul.f32 %v2255, 0.2
      %v2402 = vmul.f32 %v2257, 0.2
      %v2403 = vmul.f32 %v2259, 0.2
      %v2404 = vmul.f32 %v2261, 0.2
      %v2405 = vmul.f32 %v2265, 0.2
      %v2406 = vmul.f32 %v2267, 0.2
      %v2407 = vmul.f32 %v2269, 0.2
      %v2408 = vmul.f32 %v2271, 0.2
      %v2409 = vmul.f32 %v2275, 0.2
      %v2410 = vmul.f32 %v2277, 0.2
      %v2411 = vmul.f32 %v2279, 0.2
      %v2412 = vmul.f32 %v2281, 0.2
      %v2413 = vmul.f32 %v2285, 0.2
      %v2414 = vmul.f32 %v2287, 0.2
      %v2415 = vmul.f32 %v2289, 0.2
      %v2416 = vmul.f32 %v2291, 0.2
      %v2417 = vmul.f32 %v2295, 0.2
      %v2418 = vmul.f32 %v2297, 0.2
      %v2419 = vmul.f32 %v2299, 0.2
      %v2420 = vmul.f32 %v2301, 0.2
      %v2421 = vmul.f32 %v2305, 0.2
      %v2422 = vmul.f32 %v2307, 0.2
      %v2423 = vmul.f32 %v2309, 0.2
      %v2424 = vmul.f32 %v2311, 0.2
      %v2425 = vmul.f32 %v2315, 0.2
      %v2426 = vmul.f32 %v2317, 0.2
      %v2427 = vmul.f32 %v2319, 0.2
      %v2428 = vmul.f32 %v2321, 0.2
      %v2429 = vmul.f32 %v2325, 0.2
      %v2430 = vmul.f32 %v2327, 0.2
      %v2431 = vmul.f32 %v2329, 0.2
      %v2432 = vmul.f32 %v2331, 0.2
      %v2433 = vmul.f32 %v2335, 0.2
      %v2434 = vmul.f32 %v2337, 0.2
      %v2435 = vmul.f32 %v2339, 0.2
      %v2436 = vmul.f32 %v2341, 0.2
      %v2437 = vmul.f32 %v2345, 0.2
      %v2438 = vmul.f32 %v2347, 0.2
      %v2439 = vmul.f32 %v2349, 0.2
      %v2440 = vmul.f32 %v2351, 0.2
      %v2441 = vmul.f32 %v2355, 0.2
      %v2442 = vmul.f32 %v2357, 0.2
      %v2443 = vmul.f32 %v2359, 0.2
      %v2444 = vmul.f32 %v2361, 0.2
      %v2445 = vmul.f32 %v2365, 0.2
      %v2446 = vmul.f32 %v2367, 0.2
      %v2447 = vmul.f32 %v2369, 0.2
      %v2448 = vmul.f32 %v2371, 0.2
      %v2449 = vmul.f32 %v2375, 0.2
      %v2450 = vmul.f32 %v2377, 0.2
      %v2451 = vmul.f32 %v2379, 0.2
      %v2452 = vmul.f32 %v2381, 0.2
      %v2453 = vmul.f32 %v2385, 0.2
      %v2454 = vmul.f32 %v2387, 0.2
      %v2455 = vmul.f32 %v2389, 0.2
      %v2456 = vmul.f32 %v2391, 0.2
      %v2457 = vmax.f32 %v2235, %v2393
      %v2458 = vmax.f32 %v2237, %v2394
      %v2459 = vmax.f32 %v2239, %v2395
      %v2460 = vmax.f32 %v2241, %v2396
      %v2461 = vmax.f32 %v2245, %v2397
      %v2462 = vmax.f32 %v2247, %v2398
      %v2463 = vmax.f32 %v2249, %v2399
      %v2464 = vmax.f32 %v2251, %v2400
      %v2465 = vmax.f32 %v2255, %v2401
      %v2466 = vmax.f32 %v2257, %v2402
      %v2467 = vmax.f32 %v2259, %v2403
      %v2468 = vmax.f32 %v2261, %v2404
      %v2469 = vmax.f32 %v2265, %v2405
      %v2470 = vmax.f32 %v2267, %v2406
      %v2471 = vmax.f32 %v2269, %v2407
      %v2472 = vmax.f32 %v2271, %v2408
      %v2473 = vmax.f32 %v2275, %v2409
      %v2474 = vmax.f32 %v2277, %v2410
      %v2475 = vmax.f32 %v2279, %v2411
      %v2476 = vmax.f32 %v2281, %v2412
      %v2477 = vmax.f32 %v2285, %v2413
      %v2478 = vmax.f32 %v2287, %v2414
      %v2479 = vmax.f32 %v2289, %v2415
      %v2480 = vmax.f32 %v2291, %v2416
      %v2481 = vmax.f32 %v2295, %v2417
      %v2482 = vmax.f32 %v2297, %v2418
      %v2483 = vmax.f32 %v2299, %v2419
      %v2484 = vmax.f32 %v2301, %v2420
      %v2485 = vmax.f32 %v2305, %v2421
      %v2486 = vmax.f32 %v2307, %v2422
      %v2487 = vmax.f32 %v2309, %v2423
      %v2488 = vmax.f32 %v2311, %v2424
      %v2489 = vmax.f32 %v2315, %v2425
      %v2490 = vmax.f32 %v2317, %v2426
      %v2491 = vmax.f32 %v2319, %v2427
      %v2492 = vmax.f32 %v2321, %v2428
      %v2493 = vmax.f32 %v2325, %v2429
      %v2494 = vmax.f32 %v2327, %v2430
      %v2495 = vmax.f32 %v2329, %v2431
      %v2496 = vmax.f32 %v2331, %v2432
      %v2497 = vmax.f32 %v2335, %v2433
      %v2498 = vmax.f32 %v2337, %v2434
      %v2499 = vmax.f32 %v2339, %v2435
      %v2500 = vmax.f32 %v2341, %v2436
      %v2501 = vmax.f32 %v2345, %v2437
      %v2502 = vmax.f32 %v2347, %v2438
      %v2503 = vmax.f32 %v2349, %v2439
      %v2504 = vmax.f32 %v2351, %v2440
      %v2505 = vmax.f32 %v2355, %v2441
      %v2506 = vmax.f32 %v2357, %v2442
      %v2507 = vmax.f32 %v2359, %v2443
      %v2508 = vmax.f32 %v2361, %v2444
      %v2509 = vmax.f32 %v2365, %v2445
      %v2510 = vmax.f32 %v2367, %v2446
      %v2511 = vmax.f32 %v2369, %v2447
      %v2512 = vmax.f32 %v2371, %v2448
      %v2513 = vmax.f32 %v2375, %v2449
      %v2514 = vmax.f32 %v2377, %v2450
      %v2515 = vmax.f32 %v2379, %v2451
      %v2516 = vmax.f32 %v2381, %v2452
      %v2517 = vmax.f32 %v2385, %v2453
      %v2518 = vmax.f32 %v2387, %v2454
      %v2519 = vmax.f32 %v2389, %v2455
      %v2520 = vmax.f32 %v2391, %v2456
      %2521 = vst [vmem:[%s274] sm:$0xff] %v2457
      %2522 = vst [vmem:[%s274 + $0x8] sm:$0xff] %v2458
      %2523 = vst [vmem:[%s274 + $0x10] sm:$0xff] %v2459
      %2524 = vst [vmem:[%s274 + $0x18] sm:$0xff] %v2460
      %2525 = vst [vmem:[%s274 + $0x20] sm:$0xff] %v2461
      %2526 = vst [vmem:[%s274 + $0x28] sm:$0xff] %v2462
      %2527 = vst [vmem:[%s274 + $0x30] sm:$0xff] %v2463
      %2528 = vst [vmem:[%s274 + $0x38] sm:$0xff] %v2464
      %2529 = vst [vmem:[%s274 + $0x40] sm:$0xff] %v2465
      %2530 = vst [vmem:[%s274 + $0x48] sm:$0xff] %v2466
      %2531 = vst [vmem:[%s274 + $0x50] sm:$0xff] %v2467
      %2532 = vst [vmem:[%s274 + $0x58] sm:$0xff] %v2468
      %2533 = vst [vmem:[%s274 + $0x60] sm:$0xff] %v2469
      %2534 = vst [vmem:[%s274 + $0x68] sm:$0xff] %v2470
      %2535 = vst [vmem:[%s274 + $0x70] sm:$0xff] %v2471
      %2536 = vst [vmem:[%s274 + $0x78] sm:$0xff] %v2472
      %2537 = vst [vmem:[%s274 + $0x80] sm:$0xff] %v2473
      %2538 = vst [vmem:[%s274 + $0x88] sm:$0xff] %v2474
      %2539 = vst [vmem:[%s274 + $0x90] sm:$0xff] %v2475
      %2540 = vst [vmem:[%s274 + $0x98] sm:$0xff] %v2476
      %2541 = vst [vmem:[%s274 + $0xa0] sm:$0xff] %v2477
      %2542 = vst [vmem:[%s274 + $0xa8] sm:$0xff] %v2478
      %2543 = vst [vmem:[%s274 + $0xb0] sm:$0xff] %v2479
      %2544 = vst [vmem:[%s274 + $0xb8] sm:$0xff] %v2480
      %2545 = vst [vmem:[%s274 + $0xc0] sm:$0xff] %v2481
      %2546 = vst [vmem:[%s274 + $0xc8] sm:$0xff] %v2482
      %2547 = vst [vmem:[%s274 + $0xd0] sm:$0xff] %v2483
      %2548 = vst [vmem:[%s274 + $0xd8] sm:$0xff] %v2484
      %2549 = vst [vmem:[%s274 + $0xe0] sm:$0xff] %v2485
      %2550 = vst [vmem:[%s274 + $0xe8] sm:$0xff] %v2486
      %2551 = vst [vmem:[%s274 + $0xf0] sm:$0xff] %v2487
      %2552 = vst [vmem:[%s274 + $0xf8] sm:$0xff] %v2488
      %2553 = vst [vmem:[%s274 + $0x100] sm:$0xff] %v2489
      %2554 = vst [vmem:[%s274 + $0x108] sm:$0xff] %v2490
      %2555 = vst [vmem:[%s274 + $0x110] sm:$0xff] %v2491
      %2556 = vst [vmem:[%s274 + $0x118] sm:$0xff] %v2492
      %2557 = vst [vmem:[%s274 + $0x120] sm:$0xff] %v2493
      %2558 = vst [vmem:[%s274 + $0x128] sm:$0xff] %v2494
      %2559 = vst [vmem:[%s274 + $0x130] sm:$0xff] %v2495
      %2560 = vst [vmem:[%s274 + $0x138] sm:$0xff] %v2496
      %2561 = vst [vmem:[%s274 + $0x140] sm:$0xff] %v2497
      %2562 = vst [vmem:[%s274 + $0x148] sm:$0xff] %v2498
      %2563 = vst [vmem:[%s274 + $0x150] sm:$0xff] %v2499
      %2564 = vst [vmem:[%s274 + $0x158] sm:$0xff] %v2500
      %2565 = vst [vmem:[%s274 + $0x160] sm:$0xff] %v2501
      %2566 = vst [vmem:[%s274 + $0x168] sm:$0xff] %v2502
      %2567 = vst [vmem:[%s274 + $0x170] sm:$0xff] %v2503
      %2568 = vst [vmem:[%s274 + $0x178] sm:$0xff] %v2504
      %2569 = vst [vmem:[%s274 + $0x180] sm:$0xff] %v2505
      %2570 = vst [vmem:[%s274 + $0x188] sm:$0xff] %v2506
      %2571 = vst [vmem:[%s274 + $0x190] sm:$0xff] %v2507
      %2572 = vst [vmem:[%s274 + $0x198] sm:$0xff] %v2508
      %2573 = vst [vmem:[%s274 + $0x1a0] sm:$0xff] %v2509
      %2574 = vst [vmem:[%s274 + $0x1a8] sm:$0xff] %v2510
      %2575 = vst [vmem:[%s274 + $0x1b0] sm:$0xff] %v2511
      %2576 = vst [vmem:[%s274 + $0x1b8] sm:$0xff] %v2512
      %2577 = vst [vmem:[%s274 + $0x1c0] sm:$0xff] %v2513
      %2578 = vst [vmem:[%s274 + $0x1c8] sm:$0xff] %v2514
      %2579 = vst [vmem:[%s274 + $0x1d0] sm:$0xff] %v2515
      %2580 = vst [vmem:[%s274 + $0x1d8] sm:$0xff] %v2516
      %2581 = vst [vmem:[%s274 + $0x1e0] sm:$0xff] %v2517
      %2582 = vst [vmem:[%s274 + $0x1e8] sm:$0xff] %v2518
      %2583 = vst [vmem:[%s274 + $0x1f0] sm:$0xff] %v2519
      %2584 = vst [vmem:[%s274 + $0x1f8] sm:$0xff] %v2520
      %s2585 = smul.u32 32, %s21
      %s2586 = smul.u32 2, %s20
      %p2587 = scmp.lt.s32.totalorder %s19, 1
      %s2588 = scalar_select %p2587, %s19, 1
      %p2589 = scmp.lt.s32.totalorder %s2585, 31
      %s2590 = scalar_select %p2589, %s2585, 31
      %p2591 = scmp.lt.s32.totalorder %s2586, 1
      %s2592 = scalar_select %p2591, %s2586, 1
      %s2593 = smul.addr %s2590, 2
      %s2594 = sadd.s32 %s2592, %s2593
      %s2595 = smul.addr %s2588, 64
      %s2596 = sadd.s32 %s2594, %s2595
      %s2597 = smul.addr %s2596, 8
      %s2598 = scalar_lea.vmem %s3, %s2597
      // Predicated region
      $region33: #{convdu4_forward.1} parent=31 // pred_check
        %p2599 = pneg %p135
      $region34: #{convdu4_forward.1} parent=31 // pred_check_branch
        %2601 = sbr.rel (%p2599) target = $region36
      $region35: #{convdu4_forward.1} parent=31 // pred_region
        %s2602 = smul.u32 32, %s21
        %s2603 = smul.u32 2, %s20
      $region36: #{convdu4_forward.1} parent=31 // pred_fallthru
        _
    $region32: #{convdu4_forward.1} parent=5 // pred_fallthru
      _
    %p2604 = scmp.le.s32.totalorder 2, %s9
    // Predicated region
    $region37: #{convdu4_forward.1} parent=5 // pred_check
      %p2605 = pneg %p2604
    $region38: #{convdu4_forward.1} parent=5 // pred_check_branch
      %2607 = sbr.rel (%p2605) target = $region40
    $region39: #{convdu4_forward.1} parent=5 // pred_region
      %s2608 = ssub.s32 %s9, 2
      // Predicated region
      $region41: #{convdu4_forward.1} parent=39 // pred_check
        %p2609 = pneg %p141
      $region42: #{convdu4_forward.1} parent=39 // pred_check_branch
        %2611 = sbr.rel (%p2609) target = $region44
      $region43: #{convdu4_forward.1} parent=39 // pred_region
        %s2612 = smul.u32 32, %s24
        %s2613 = smul.u32 2, %s23
        %p2614 = scmp.lt.s32.totalorder %s22, 1
        %s2615 = scalar_select %p2614, %s22, 1
        %p2616 = scmp.lt.s32.totalorder %s2612, 31
        %s2617 = scalar_select %p2616, %s2612, 31
        %p2618 = scmp.lt.s32.totalorder %s2613, 1
        %s2619 = scalar_select %p2618, %s2613, 1
        %s2620 = smul.addr %s2617, 2
        %s2621 = sadd.s32 %s2619, %s2620
        %s2622 = smul.addr %s2615, 64
        %s2623 = sadd.s32 %s2621, %s2622
        %s2624 = smul.addr %s2623, 8
        %s2625 = scalar_lea.vmem %s3, %s2624
      $region44: #{convdu4_forward.1} parent=39 // pred_fallthru
        _
    $region40: #{convdu4_forward.1} parent=5 // pred_fallthru
      _
  $region6: #{convdu4_forward.1} parent=0 // loop_footer
    %s13 = sadd.s32 1, %s9
  $region7: #{convdu4_forward.1} parent=0 // loop_footer_branch
    %8 = sbr.rel target = $region3
  $region8: #{convdu4_forward.1} parent=0 // loop_exit
    _

</llo_original>
